<compile_context>
chip_gen: v5e
topology: v5e:2x2
jax: 0.10.0
libtpu: 0.0.40
codegen_flags: <defaults>
</compile_context>

<pallas_src>
import jax
import jax.numpy as jnp
from jax.experimental import pallas as pl
from jax.experimental.pallas import tpu as pltpu

SEQ_LEN = 8
INPUT_DIM = 64
HIDDEN = INPUT_DIM // 2          # 32
N_FEATURES = 2
NUM_LAYERS = 3
GATES = 4 * HIDDEN               # 128 (i, f, g, o)
OUT_PAD = 128                    # lane-dense padded output width

# ---- packed-weight row layout (all segments 8-row aligned, 128 lanes) ------
ROW_W_IH0 = 0                    # (64, 128)  layer-0 input weights (x2 g-cols)
ROW_W_HH0 = 64                   # (32, 128)  layer-0 recurrent weights
ROW_S1 = 96                      # (64, 128)  [W_hh1 ; W_ih1] stacked
ROW_S2 = 160                     # (64, 128)  [W_hh2 ; W_ih2] stacked
ROW_BIAS = 224                   # 4 rows: b0, b1, b2, b_lin (lane-padded)
ROW_W_LIN = 232                  # (32, 128)  linear weights (lane-padded)
PACKED_ROWS = 264                # 33 * 8


def decoder_kernel(x_ref, w_ref, out_ref):
    """Whole decoder forward in one invocation (fully unrolled wavefront)."""
    H, T, L = HIDDEN, SEQ_LEN, NUM_LAYERS

    x0 = x_ref[...]                                         # (1, INPUT_DIM)
    b_blk = w_ref[ROW_BIAS:ROW_BIAS + 4, :]                 # (4, 128)

    # Layer 0's input is constant over time -> fold its projection into the
    # bias, computed exactly ONCE (removes 7 of 8 serial layer-0 matmuls).
    b0_eff = b_blk[0:1, :] + jnp.dot(
        x0, w_ref[ROW_W_IH0:ROW_W_IH0 + INPUT_DIM, :],
        preferred_element_type=jnp.float32)
    b = [b0_eff, b_blk[1:2, :], b_blk[2:3, :]]              # (1, 128) each

    def lstm_cell(gates, c_prev):
        # ONE full-width sigmoid over the whole (1, 128) gate vector (single
        # EUP launch), then lane-slice.  The g-gate pre-activation was scaled
        # by 2 in the packed weights, so tanh(g) == 2*sigmoid(2g) - 1 comes
        # out of the same sigmoid: one VPU FMA instead of a dependent tanh.
        sg = jax.nn.sigmoid(gates)
        i_g = sg[:, 0 * H:1 * H]
        f_g = sg[:, 1 * H:2 * H]
        g_g = 2.0 * sg[:, 2 * H:3 * H] - 1.0
        o_g = sg[:, 3 * H:4 * H]
        c_new = f_g * c_prev + i_g * g_g
        h_new = o_g * jnp.tanh(c_new)
        return h_new, c_new

    zero = jnp.zeros((1, H), jnp.float32)
    h = [zero] * L
    c = [zero] * L
    top_h = [None] * T

    # ---- wavefront over (layer, time): stage s handles cells (l, t=s-l) ----
    # Cells within a stage are independent -> dependent-matmul chain length
    # is T + L - 1 = 10 instead of 24.
    for s in range(T + L - 1):
        h_new = list(h)
        c_new = list(c)
        for l in range(L):
            t = s - l
            if 0 <= t < T:
                if l == 0:
                    gates = jnp.dot(
                        h[0], w_ref[ROW_W_HH0:ROW_W_HH0 + H, :],
                        preferred_element_type=jnp.float32) + b[0]
                else:
                    # Fused recurrence: one (1,64)@(64,128) dot against the
                    # pre-stacked [W_hh_l ; W_ih_l] slab (LHS = lane-concat of
                    # this layer's and the previous layer's hidden states).
                    row0 = ROW_S1 if l == 1 else ROW_S2
                    lhs = jnp.concatenate([h[l], h[l - 1]], axis=1)  # (1, 2H)
                    gates = jnp.dot(
                        lhs, w_ref[row0:row0 + 2 * H, :],
                        preferred_element_type=jnp.float32) + b[l]
                h_new[l], c_new[l] = lstm_cell(gates, c[l])
                if l == L - 1:
                    top_h[t] = h_new[l]
        h, c = h_new, c_new

    # ---- deferred output projection -----------------------------------------
    # One (8,32)@(32,128) matmul + ONE unmasked full-tile (8,128) store,
    # instead of 8 tiny dots and 8 sublane-masked stores; also keeps the
    # linear weights out of the live set during the recurrence.
    top = jnp.concatenate(top_h, axis=0)                    # (T, H)
    w_lin = w_ref[ROW_W_LIN:ROW_W_LIN + H, :]               # (H, 128), padded
    b_lin = w_ref[ROW_BIAS + 3:ROW_BIAS + 4, :]             # (1, 128), padded
    out_ref[...] = jnp.dot(top, w_lin,
                           preferred_element_type=jnp.float32) + b_lin


def init_params(key):
    """Deterministic PyTorch-style uniform(-k, k) init (k = 1/sqrt(H))."""
    k = 1.0 / jnp.sqrt(jnp.float32(HIDDEN))
    keys = jax.random.split(key, NUM_LAYERS * 4 + 2)
    params = {}
    idx = 0
    for layer in range(NUM_LAYERS):
        in_dim = INPUT_DIM if layer == 0 else HIDDEN
        w_ih = jax.random.uniform(keys[idx], (4 * HIDDEN, in_dim),
                                  jnp.float32, -k, k); idx += 1
        w_hh = jax.random.uniform(keys[idx], (4 * HIDDEN, HIDDEN),
                                  jnp.float32, -k, k); idx += 1
        b_ih = jax.random.uniform(keys[idx], (4 * HIDDEN,),
                                  jnp.float32, -k, k); idx += 1
        b_hh = jax.random.uniform(keys[idx], (4 * HIDDEN,),
                                  jnp.float32, -k, k); idx += 1
        params[f"l{layer}"] = dict(
            w_ih_t=w_ih.T,                                  # (in_dim, 4H)
            w_hh_t=w_hh.T,                                  # (H, 4H)
            b=(b_ih + b_hh).reshape(1, 4 * HIDDEN),         # fused bias (1, 4H)
        )
    w_lin = jax.random.uniform(keys[idx], (N_FEATURES, HIDDEN),
                               jnp.float32, -k, k); idx += 1
    b_lin = jax.random.uniform(keys[idx], (N_FEATURES,),
                               jnp.float32, -k, k)
    params["lin"] = dict(w_t=w_lin.T,                        # (H, F)
                         b=b_lin.reshape(1, N_FEATURES))
    return params


def prepare_packed_weights(params):
    """Pack every weight/bias into one (PACKED_ROWS, 128) f32 slab.

    Applies the x2 fold to the g-gate columns (so the kernel can recover
    tanh(g) from the shared full-width sigmoid) and lane-pads the final
    Linear weights/bias to 128 so the output store is unmasked.
    """
    H = HIDDEN

    def fold_g(w_t):
        return w_t.at[..., 2 * H:3 * H].multiply(2.0)

    p0, p1, p2 = params["l0"], params["l1"], params["l2"]
    packed = jnp.zeros((PACKED_ROWS, GATES), jnp.float32)
    packed = packed.at[ROW_W_IH0:ROW_W_IH0 + INPUT_DIM, :].set(fold_g(p0["w_ih_t"]))
    packed = packed.at[ROW_W_HH0:ROW_W_HH0 + H, :].set(fold_g(p0["w_hh_t"]))
    # stacked [W_hh ; W_ih] for layers 1 and 2 (matches LHS concat order)
    packed = packed.at[ROW_S1:ROW_S1 + H, :].set(fold_g(p1["w_hh_t"]))
    packed = packed.at[ROW_S1 + H:ROW_S1 + 2 * H, :].set(fold_g(p1["w_ih_t"]))
    packed = packed.at[ROW_S2:ROW_S2 + H, :].set(fold_g(p2["w_hh_t"]))
    packed = packed.at[ROW_S2 + H:ROW_S2 + 2 * H, :].set(fold_g(p2["w_ih_t"]))
    # biases: b0, b1, b2, b_lin (lane-padded)
    packed = packed.at[ROW_BIAS + 0:ROW_BIAS + 1, :].set(fold_g(p0["b"]))
    packed = packed.at[ROW_BIAS + 1:ROW_BIAS + 2, :].set(fold_g(p1["b"]))
    packed = packed.at[ROW_BIAS + 2:ROW_BIAS + 3, :].set(fold_g(p2["b"]))
    packed = packed.at[ROW_BIAS + 3:ROW_BIAS + 4, :N_FEATURES].set(params["lin"]["b"])
    # lane-padded linear weights
    packed = packed.at[ROW_W_LIN:ROW_W_LIN + H, :N_FEATURES].set(params["lin"]["w_t"])
    return packed


def decoder_forward(x, packed_w):
    """x: (1, INPUT_DIM)  ->  (1, SEQ_LEN, N_FEATURES), matching PyTorch."""
    x_row = x.reshape(-1, INPUT_DIM).astype(jnp.float32)     # (1, D)
    # The PyTorch module reshapes to (1, -1, D): this kernel assumes batch==1.
    assert x_row.shape[0] == 1, "Decoder kernel supports batch == 1 only"

    out = pl.pallas_call(
        decoder_kernel,
        out_shape=jax.ShapeDtypeStruct((SEQ_LEN, OUT_PAD), jnp.float32),
        in_specs=[pl.BlockSpec(memory_space=pltpu.MemorySpace.VMEM),
                  pl.BlockSpec(memory_space=pltpu.MemorySpace.VMEM)],
        out_specs=pl.BlockSpec(memory_space=pltpu.MemorySpace.VMEM),
    )(x_row, packed_w)
    # Slice the lane-padding back off and add the batch dim.
    return out[None, :, :N_FEATURES]                         # (1, T, F)


def decoder_reference(x, params):
    """Pure-JAX, PyTorch-faithful reference (no folds) for correctness."""
    x_flat = x.reshape(-1, INPUT_DIM).astype(jnp.float32)
    seq = jnp.tile(x_flat, (SEQ_LEN, 1))
    H = HIDDEN
    for layer in range(NUM_LAYERS):
        p = params[f"l{layer}"]
        h = jnp.zeros((1, H), jnp.float32)
        c = jnp.zeros((1, H), jnp.float32)
        outs = []
        for t in range(SEQ_LEN):
            gates = seq[t:t + 1] @ p["w_ih_t"] + h @ p["w_hh_t"] + p["b"]
            i_g = jax.nn.sigmoid(gates[:, 0 * H:1 * H])
            f_g = jax.nn.sigmoid(gates[:, 1 * H:2 * H])
            g_g = jnp.tanh(gates[:, 2 * H:3 * H])
            o_g = jax.nn.sigmoid(gates[:, 3 * H:4 * H])
            c = f_g * c + i_g * g_g
            h = o_g * jnp.tanh(c)
            outs.append(h)
        seq = jnp.concatenate(outs, axis=0)
    y = seq @ params["lin"]["w_t"] + params["lin"]["b"]
    return y[None, :, :]


if __name__ == "__main__":
    key = jax.random.PRNGKey(0)
    k_param, k_x = jax.random.split(key)
    params = init_params(k_param)
    packed_w = prepare_packed_weights(params)
    x = jax.random.normal(k_x, (1, INPUT_DIM), jnp.float32)

    y = decoder_forward(x, packed_w)
    y = jax.block_until_ready(y)

    y_ref = decoder_reference(x, params)
    assert y.shape == (1, SEQ_LEN, N_FEATURES)
    assert jnp.allclose(y, y_ref, atol=1e-4, rtol=1e-4), \
        f"max abs err {jnp.max(jnp.abs(y - y_ref))}"
    print("KERNEL_OK")
</pallas_src>

<mosaic_0001>
module attributes {stable_mosaic.version = 11 : i64} {
  func.func @decoder_kernel(%arg0: memref<1x64xf32, #tpu.memory_space<vmem>>, %arg1: memref<264x128xf32, #tpu.memory_space<vmem>>, %arg2: memref<8x128xf32, #tpu.memory_space<vmem>>) attributes {dimension_semantics = [], scalar_prefetch = 0 : i64, scratch_operands = 0 : i64, tpu.core_type = #tpu.core_type<tc>} {
    %c0 = arith.constant 0 : index
    %c0_0 = arith.constant 0 : index
    %0 = vector.load %arg0[%c0, %c0_0] : memref<1x64xf32, #tpu.memory_space<vmem>>, vector<1x64xf32>
    %c224 = arith.constant 224 : index
    %c0_1 = arith.constant 0 : index
    %1 = vector.load %arg1[%c224, %c0_1] : memref<264x128xf32, #tpu.memory_space<vmem>>, vector<4x128xf32>
    %2 = vector.extract_strided_slice %1 {offsets = [0, 0], sizes = [1, 128], strides = [1, 1]} : vector<4x128xf32> to vector<1x128xf32>
    %c0_2 = arith.constant 0 : index
    %c0_3 = arith.constant 0 : index
    %3 = vector.load %arg1[%c0_2, %c0_3] : memref<264x128xf32, #tpu.memory_space<vmem>>, vector<64x128xf32>
    %cst = arith.constant dense<0.000000e+00> : vector<1x128xf32>
    %4 = tpu.matmul %0, %3, %cst {dimension_numbers = #tpu.dot_dimension_numbers<[1], [0], [0], [1], [0, 0, 1, 1], [], []>} : vector<1x64xf32>, vector<64x128xf32>, vector<1x128xf32> -> vector<1x128xf32>
    %5 = arith.addf %2, %4 : vector<1x128xf32>
    %6 = vector.extract_strided_slice %1 {offsets = [1, 0], sizes = [1, 128], strides = [1, 1]} : vector<4x128xf32> to vector<1x128xf32>
    %7 = vector.extract_strided_slice %1 {offsets = [2, 0], sizes = [1, 128], strides = [1, 1]} : vector<4x128xf32> to vector<1x128xf32>
    %cst_4 = arith.constant 0.000000e+00 : f32
    %8 = vector.broadcast %cst_4 : f32 to vector<1x32xf32>
    %c64 = arith.constant 64 : index
    %c0_5 = arith.constant 0 : index
    %9 = vector.load %arg1[%c64, %c0_5] : memref<264x128xf32, #tpu.memory_space<vmem>>, vector<32x128xf32>
    %cst_6 = arith.constant dense<0.000000e+00> : vector<1x128xf32>
    %10 = tpu.matmul %8, %9, %cst_6 {dimension_numbers = #tpu.dot_dimension_numbers<[1], [0], [0], [1], [0, 0, 1, 1], [], []>} : vector<1x32xf32>, vector<32x128xf32>, vector<1x128xf32> -> vector<1x128xf32>
    %11 = arith.addf %10, %5 : vector<1x128xf32>
    %12 = arith.negf %11 : vector<1x128xf32>
    %13 = math.exp %12 : vector<1x128xf32>
    %cst_7 = arith.constant 1.000000e+00 : f32
    %14 = vector.broadcast %cst_7 : f32 to vector<1x128xf32>
    %15 = arith.addf %14, %13 : vector<1x128xf32>
    %16 = arith.divf %14, %15 : vector<1x128xf32>
    %17 = vector.extract_strided_slice %16 {offsets = [0, 0], sizes = [1, 32], strides = [1, 1]} : vector<1x128xf32> to vector<1x32xf32>
    %18 = vector.extract_strided_slice %16 {offsets = [0, 32], sizes = [1, 32], strides = [1, 1]} : vector<1x128xf32> to vector<1x32xf32>
    %19 = vector.extract_strided_slice %16 {offsets = [0, 64], sizes = [1, 32], strides = [1, 1]} : vector<1x128xf32> to vector<1x32xf32>
    %cst_8 = arith.constant 2.000000e+00 : f32
    %20 = vector.broadcast %cst_8 : f32 to vector<1x32xf32>
    %21 = arith.mulf %20, %19 : vector<1x32xf32>
    %cst_9 = arith.constant 1.000000e+00 : f32
    %22 = vector.broadcast %cst_9 : f32 to vector<1x32xf32>
    %23 = arith.subf %21, %22 : vector<1x32xf32>
    %24 = vector.extract_strided_slice %16 {offsets = [0, 96], sizes = [1, 32], strides = [1, 1]} : vector<1x128xf32> to vector<1x32xf32>
    %25 = arith.mulf %18, %8 : vector<1x32xf32>
    %26 = arith.mulf %17, %23 : vector<1x32xf32>
    %27 = arith.addf %25, %26 : vector<1x32xf32>
    %28 = math.tanh %27 : vector<1x32xf32>
    %29 = arith.mulf %24, %28 : vector<1x32xf32>
    %c64_10 = arith.constant 64 : index
    %c0_11 = arith.constant 0 : index
    %30 = vector.load %arg1[%c64_10, %c0_11] : memref<264x128xf32, #tpu.memory_space<vmem>>, vector<32x128xf32>
    %cst_12 = arith.constant dense<0.000000e+00> : vector<1x128xf32>
    %31 = tpu.matmul %29, %30, %cst_12 {dimension_numbers = #tpu.dot_dimension_numbers<[1], [0], [0], [1], [0, 0, 1, 1], [], []>} : vector<1x32xf32>, vector<32x128xf32>, vector<1x128xf32> -> vector<1x128xf32>
    %32 = arith.addf %31, %5 : vector<1x128xf32>
    %33 = arith.negf %32 : vector<1x128xf32>
    %34 = math.exp %33 : vector<1x128xf32>
    %cst_13 = arith.constant 1.000000e+00 : f32
    %35 = vector.broadcast %cst_13 : f32 to vector<1x128xf32>
    %36 = arith.addf %35, %34 : vector<1x128xf32>
    %37 = arith.divf %35, %36 : vector<1x128xf32>
    %38 = vector.extract_strided_slice %37 {offsets = [0, 0], sizes = [1, 32], strides = [1, 1]} : vector<1x128xf32> to vector<1x32xf32>
    %39 = vector.extract_strided_slice %37 {offsets = [0, 32], sizes = [1, 32], strides = [1, 1]} : vector<1x128xf32> to vector<1x32xf32>
    %40 = vector.extract_strided_slice %37 {offsets = [0, 64], sizes = [1, 32], strides = [1, 1]} : vector<1x128xf32> to vector<1x32xf32>
    %cst_14 = arith.constant 2.000000e+00 : f32
    %41 = vector.broadcast %cst_14 : f32 to vector<1x32xf32>
    %42 = arith.mulf %41, %40 : vector<1x32xf32>
    %cst_15 = arith.constant 1.000000e+00 : f32
    %43 = vector.broadcast %cst_15 : f32 to vector<1x32xf32>
    %44 = arith.subf %42, %43 : vector<1x32xf32>
    %45 = vector.extract_strided_slice %37 {offsets = [0, 96], sizes = [1, 32], strides = [1, 1]} : vector<1x128xf32> to vector<1x32xf32>
    %46 = arith.mulf %39, %27 : vector<1x32xf32>
    %47 = arith.mulf %38, %44 : vector<1x32xf32>
    %48 = arith.addf %46, %47 : vector<1x32xf32>
    %49 = math.tanh %48 : vector<1x32xf32>
    %50 = arith.mulf %45, %49 : vector<1x32xf32>
    %51 = tpu.concatenate %8, %29 in 1 : vector<1x32xf32>, vector<1x32xf32> -> vector<1x64xf32>
    %c96 = arith.constant 96 : index
    %c0_16 = arith.constant 0 : index
    %52 = vector.load %arg1[%c96, %c0_16] : memref<264x128xf32, #tpu.memory_space<vmem>>, vector<64x128xf32>
    %cst_17 = arith.constant dense<0.000000e+00> : vector<1x128xf32>
    %53 = tpu.matmul %51, %52, %cst_17 {dimension_numbers = #tpu.dot_dimension_numbers<[1], [0], [0], [1], [0, 0, 1, 1], [], []>} : vector<1x64xf32>, vector<64x128xf32>, vector<1x128xf32> -> vector<1x128xf32>
    %54 = arith.addf %53, %6 : vector<1x128xf32>
    %55 = arith.negf %54 : vector<1x128xf32>
    %56 = math.exp %55 : vector<1x128xf32>
    %cst_18 = arith.constant 1.000000e+00 : f32
    %57 = vector.broadcast %cst_18 : f32 to vector<1x128xf32>
    %58 = arith.addf %57, %56 : vector<1x128xf32>
    %59 = arith.divf %57, %58 : vector<1x128xf32>
    %60 = vector.extract_strided_slice %59 {offsets = [0, 0], sizes = [1, 32], strides = [1, 1]} : vector<1x128xf32> to vector<1x32xf32>
    %61 = vector.extract_strided_slice %59 {offsets = [0, 32], sizes = [1, 32], strides = [1, 1]} : vector<1x128xf32> to vector<1x32xf32>
    %62 = vector.extract_strided_slice %59 {offsets = [0, 64], sizes = [1, 32], strides = [1, 1]} : vector<1x128xf32> to vector<1x32xf32>
    %cst_19 = arith.constant 2.000000e+00 : f32
    %63 = vector.broadcast %cst_19 : f32 to vector<1x32xf32>
    %64 = arith.mulf %63, %62 : vector<1x32xf32>
    %cst_20 = arith.constant 1.000000e+00 : f32
    %65 = vector.broadcast %cst_20 : f32 to vector<1x32xf32>
    %66 = arith.subf %64, %65 : vector<1x32xf32>
    %67 = vector.extract_strided_slice %59 {offsets = [0, 96], sizes = [1, 32], strides = [1, 1]} : vector<1x128xf32> to vector<1x32xf32>
    %68 = arith.mulf %61, %8 : vector<1x32xf32>
    %69 = arith.mulf %60, %66 : vector<1x32xf32>
    %70 = arith.addf %68, %69 : vector<1x32xf32>
    %71 = math.tanh %70 : vector<1x32xf32>
    %72 = arith.mulf %67, %71 : vector<1x32xf32>
    %c64_21 = arith.constant 64 : index
    %c0_22 = arith.constant 0 : index
    %73 = vector.load %arg1[%c64_21, %c0_22] : memref<264x128xf32, #tpu.memory_space<vmem>>, vector<32x128xf32>
    %cst_23 = arith.constant dense<0.000000e+00> : vector<1x128xf32>
    %74 = tpu.matmul %50, %73, %cst_23 {dimension_numbers = #tpu.dot_dimension_numbers<[1], [0], [0], [1], [0, 0, 1, 1], [], []>} : vector<1x32xf32>, vector<32x128xf32>, vector<1x128xf32> -> vector<1x128xf32>
    %75 = arith.addf %74, %5 : vector<1x128xf32>
    %76 = arith.negf %75 : vector<1x128xf32>
    %77 = math.exp %76 : vector<1x128xf32>
    %cst_24 = arith.constant 1.000000e+00 : f32
    %78 = vector.broadcast %cst_24 : f32 to vector<1x128xf32>
    %79 = arith.addf %78, %77 : vector<1x128xf32>
    %80 = arith.divf %78, %79 : vector<1x128xf32>
    %81 = vector.extract_strided_slice %80 {offsets = [0, 0], sizes = [1, 32], strides = [1, 1]} : vector<1x128xf32> to vector<1x32xf32>
    %82 = vector.extract_strided_slice %80 {offsets = [0, 32], sizes = [1, 32], strides = [1, 1]} : vector<1x128xf32> to vector<1x32xf32>
    %83 = vector.extract_strided_slice %80 {offsets = [0, 64], sizes = [1, 32], strides = [1, 1]} : vector<1x128xf32> to vector<1x32xf32>
    %cst_25 = arith.constant 2.000000e+00 : f32
    %84 = vector.broadcast %cst_25 : f32 to vector<1x32xf32>
    %85 = arith.mulf %84, %83 : vector<1x32xf32>
    %cst_26 = arith.constant 1.000000e+00 : f32
    %86 = vector.broadcast %cst_26 : f32 to vector<1x32xf32>
    %87 = arith.subf %85, %86 : vector<1x32xf32>
    %88 = vector.extract_strided_slice %80 {offsets = [0, 96], sizes = [1, 32], strides = [1, 1]} : vector<1x128xf32> to vector<1x32xf32>
    %89 = arith.mulf %82, %48 : vector<1x32xf32>
    %90 = arith.mulf %81, %87 : vector<1x32xf32>
    %91 = arith.addf %89, %90 : vector<1x32xf32>
    %92 = math.tanh %91 : vector<1x32xf32>
    %93 = arith.mulf %88, %92 : vector<1x32xf32>
    %94 = tpu.concatenate %72, %50 in 1 : vector<1x32xf32>, vector<1x32xf32> -> vector<1x64xf32>
    %c96_27 = arith.constant 96 : index
    %c0_28 = arith.constant 0 : index
    %95 = vector.load %arg1[%c96_27, %c0_28] : memref<264x128xf32, #tpu.memory_space<vmem>>, vector<64x128xf32>
    %cst_29 = arith.constant dense<0.000000e+00> : vector<1x128xf32>
    %96 = tpu.matmul %94, %95, %cst_29 {dimension_numbers = #tpu.dot_dimension_numbers<[1], [0], [0], [1], [0, 0, 1, 1], [], []>} : vector<1x64xf32>, vector<64x128xf32>, vector<1x128xf32> -> vector<1x128xf32>
    %97 = arith.addf %96, %6 : vector<1x128xf32>
    %98 = arith.negf %97 : vector<1x128xf32>
    %99 = math.exp %98 : vector<1x128xf32>
    %cst_30 = arith.constant 1.000000e+00 : f32
    %100 = vector.broadcast %cst_30 : f32 to vector<1x128xf32>
    %101 = arith.addf %100, %99 : vector<1x128xf32>
    %102 = arith.divf %100, %101 : vector<1x128xf32>
    %103 = vector.extract_strided_slice %102 {offsets = [0, 0], sizes = [1, 32], strides = [1, 1]} : vector<1x128xf32> to vector<1x32xf32>
    %104 = vector.extract_strided_slice %102 {offsets = [0, 32], sizes = [1, 32], strides = [1, 1]} : vector<1x128xf32> to vector<1x32xf32>
    %105 = vector.extract_strided_slice %102 {offsets = [0, 64], sizes = [1, 32], strides = [1, 1]} : vector<1x128xf32> to vector<1x32xf32>
    %cst_31 = arith.constant 2.000000e+00 : f32
    %106 = vector.broadcast %cst_31 : f32 to vector<1x32xf32>
    %107 = arith.mulf %106, %105 : vector<1x32xf32>
    %cst_32 = arith.constant 1.000000e+00 : f32
    %108 = vector.broadcast %cst_32 : f32 to vector<1x32xf32>
    %109 = arith.subf %107, %108 : vector<1x32xf32>
    %110 = vector.extract_strided_slice %102 {offsets = [0, 96], sizes = [1, 32], strides = [1, 1]} : vector<1x128xf32> to vector<1x32xf32>
    %111 = arith.mulf %104, %70 : vector<1x32xf32>
    %112 = arith.mulf %103, %109 : vector<1x32xf32>
    %113 = arith.addf %111, %112 : vector<1x32xf32>
    %114 = math.tanh %113 : vector<1x32xf32>
    %115 = arith.mulf %110, %114 : vector<1x32xf32>
    %116 = tpu.concatenate %8, %72 in 1 : vector<1x32xf32>, vector<1x32xf32> -> vector<1x64xf32>
    %c160 = arith.constant 160 : index
    %c0_33 = arith.constant 0 : index
    %117 = vector.load %arg1[%c160, %c0_33] : memref<264x128xf32, #tpu.memory_space<vmem>>, vector<64x128xf32>
    %cst_34 = arith.constant dense<0.000000e+00> : vector<1x128xf32>
    %118 = tpu.matmul %116, %117, %cst_34 {dimension_numbers = #tpu.dot_dimension_numbers<[1], [0], [0], [1], [0, 0, 1, 1], [], []>} : vector<1x64xf32>, vector<64x128xf32>, vector<1x128xf32> -> vector<1x128xf32>
    %119 = arith.addf %118, %7 : vector<1x128xf32>
    %120 = arith.negf %119 : vector<1x128xf32>
    %121 = math.exp %120 : vector<1x128xf32>
    %cst_35 = arith.constant 1.000000e+00 : f32
    %122 = vector.broadcast %cst_35 : f32 to vector<1x128xf32>
    %123 = arith.addf %122, %121 : vector<1x128xf32>
    %124 = arith.divf %122, %123 : vector<1x128xf32>
    %125 = vector.extract_strided_slice %124 {offsets = [0, 0], sizes = [1, 32], strides = [1, 1]} : vector<1x128xf32> to vector<1x32xf32>
    %126 = vector.extract_strided_slice %124 {offsets = [0, 32], sizes = [1, 32], strides = [1, 1]} : vector<1x128xf32> to vector<1x32xf32>
    %127 = vector.extract_strided_slice %124 {offsets = [0, 64], sizes = [1, 32], strides = [1, 1]} : vector<1x128xf32> to vector<1x32xf32>
    %cst_36 = arith.constant 2.000000e+00 : f32
    %128 = vector.broadcast %cst_36 : f32 to vector<1x32xf32>
    %129 = arith.mulf %128, %127 : vector<1x32xf32>
    %cst_37 = arith.constant 1.000000e+00 : f32
    %130 = vector.broadcast %cst_37 : f32 to vector<1x32xf32>
    %131 = arith.subf %129, %130 : vector<1x32xf32>
    %132 = vector.extract_strided_slice %124 {offsets = [0, 96], sizes = [1, 32], strides = [1, 1]} : vector<1x128xf32> to vector<1x32xf32>
    %133 = arith.mulf %126, %8 : vector<1x32xf32>
    %134 = arith.mulf %125, %131 : vector<1x32xf32>
    %135 = arith.addf %133, %134 : vector<1x32xf32>
    %136 = math.tanh %135 : vector<1x32xf32>
    %137 = arith.mulf %132, %136 : vector<1x32xf32>
    %c64_38 = arith.constant 64 : index
    %c0_39 = arith.constant 0 : index
    %138 = vector.load %arg1[%c64_38, %c0_39] : memref<264x128xf32, #tpu.memory_space<vmem>>, vector<32x128xf32>
    %cst_40 = arith.constant dense<0.000000e+00> : vector<1x128xf32>
    %139 = tpu.matmul %93, %138, %cst_40 {dimension_numbers = #tpu.dot_dimension_numbers<[1], [0], [0], [1], [0, 0, 1, 1], [], []>} : vector<1x32xf32>, vector<32x128xf32>, vector<1x128xf32> -> vector<1x128xf32>
    %140 = arith.addf %139, %5 : vector<1x128xf32>
    %141 = arith.negf %140 : vector<1x128xf32>
    %142 = math.exp %141 : vector<1x128xf32>
    %cst_41 = arith.constant 1.000000e+00 : f32
    %143 = vector.broadcast %cst_41 : f32 to vector<1x128xf32>
    %144 = arith.addf %143, %142 : vector<1x128xf32>
    %145 = arith.divf %143, %144 : vector<1x128xf32>
    %146 = vector.extract_strided_slice %145 {offsets = [0, 0], sizes = [1, 32], strides = [1, 1]} : vector<1x128xf32> to vector<1x32xf32>
    %147 = vector.extract_strided_slice %145 {offsets = [0, 32], sizes = [1, 32], strides = [1, 1]} : vector<1x128xf32> to vector<1x32xf32>
    %148 = vector.extract_strided_slice %145 {offsets = [0, 64], sizes = [1, 32], strides = [1, 1]} : vector<1x128xf32> to vector<1x32xf32>
    %cst_42 = arith.constant 2.000000e+00 : f32
    %149 = vector.broadcast %cst_42 : f32 to vector<1x32xf32>
    %150 = arith.mulf %149, %148 : vector<1x32xf32>
    %cst_43 = arith.constant 1.000000e+00 : f32
    %151 = vector.broadcast %cst_43 : f32 to vector<1x32xf32>
    %152 = arith.subf %150, %151 : vector<1x32xf32>
    %153 = vector.extract_strided_slice %145 {offsets = [0, 96], sizes = [1, 32], strides = [1, 1]} : vector<1x128xf32> to vector<1x32xf32>
    %154 = arith.mulf %147, %91 : vector<1x32xf32>
    %155 = arith.mulf %146, %152 : vector<1x32xf32>
    %156 = arith.addf %154, %155 : vector<1x32xf32>
    %157 = math.tanh %156 : vector<1x32xf32>
    %158 = arith.mulf %153, %157 : vector<1x32xf32>
    %159 = tpu.concatenate %115, %93 in 1 : vector<1x32xf32>, vector<1x32xf32> -> vector<1x64xf32>
    %c96_44 = arith.constant 96 : index
    %c0_45 = arith.constant 0 : index
    %160 = vector.load %arg1[%c96_44, %c0_45] : memref<264x128xf32, #tpu.memory_space<vmem>>, vector<64x128xf32>
    %cst_46 = arith.constant dense<0.000000e+00> : vector<1x128xf32>
    %161 = tpu.matmul %159, %160, %cst_46 {dimension_numbers = #tpu.dot_dimension_numbers<[1], [0], [0], [1], [0, 0, 1, 1], [], []>} : vector<1x64xf32>, vector<64x128xf32>, vector<1x128xf32> -> vector<1x128xf32>
    %162 = arith.addf %161, %6 : vector<1x128xf32>
    %163 = arith.negf %162 : vector<1x128xf32>
    %164 = math.exp %163 : vector<1x128xf32>
    %cst_47 = arith.constant 1.000000e+00 : f32
    %165 = vector.broadcast %cst_47 : f32 to vector<1x128xf32>
    %166 = arith.addf %165, %164 : vector<1x128xf32>
    %167 = arith.divf %165, %166 : vector<1x128xf32>
    %168 = vector.extract_strided_slice %167 {offsets = [0, 0], sizes = [1, 32], strides = [1, 1]} : vector<1x128xf32> to vector<1x32xf32>
    %169 = vector.extract_strided_slice %167 {offsets = [0, 32], sizes = [1, 32], strides = [1, 1]} : vector<1x128xf32> to vector<1x32xf32>
    %170 = vector.extract_strided_slice %167 {offsets = [0, 64], sizes = [1, 32], strides = [1, 1]} : vector<1x128xf32> to vector<1x32xf32>
    %cst_48 = arith.constant 2.000000e+00 : f32
    %171 = vector.broadcast %cst_48 : f32 to vector<1x32xf32>
    %172 = arith.mulf %171, %170 : vector<1x32xf32>
    %cst_49 = arith.constant 1.000000e+00 : f32
    %173 = vector.broadcast %cst_49 : f32 to vector<1x32xf32>
    %174 = arith.subf %172, %173 : vector<1x32xf32>
    %175 = vector.extract_strided_slice %167 {offsets = [0, 96], sizes = [1, 32], strides = [1, 1]} : vector<1x128xf32> to vector<1x32xf32>
    %176 = arith.mulf %169, %113 : vector<1x32xf32>
    %177 = arith.mulf %168, %174 : vector<1x32xf32>
    %178 = arith.addf %176, %177 : vector<1x32xf32>
    %179 = math.tanh %178 : vector<1x32xf32>
    %180 = arith.mulf %175, %179 : vector<1x32xf32>
    %181 = tpu.concatenate %137, %115 in 1 : vector<1x32xf32>, vector<1x32xf32> -> vector<1x64xf32>
    %c160_50 = arith.constant 160 : index
    %c0_51 = arith.constant 0 : index
    %182 = vector.load %arg1[%c160_50, %c0_51] : memref<264x128xf32, #tpu.memory_space<vmem>>, vector<64x128xf32>
    %cst_52 = arith.constant dense<0.000000e+00> : vector<1x128xf32>
    %183 = tpu.matmul %181, %182, %cst_52 {dimension_numbers = #tpu.dot_dimension_numbers<[1], [0], [0], [1], [0, 0, 1, 1], [], []>} : vector<1x64xf32>, vector<64x128xf32>, vector<1x128xf32> -> vector<1x128xf32>
    %184 = arith.addf %183, %7 : vector<1x128xf32>
    %185 = arith.negf %184 : vector<1x128xf32>
    %186 = math.exp %185 : vector<1x128xf32>
    %cst_53 = arith.constant 1.000000e+00 : f32
    %187 = vector.broadcast %cst_53 : f32 to vector<1x128xf32>
    %188 = arith.addf %187, %186 : vector<1x128xf32>
    %189 = arith.divf %187, %188 : vector<1x128xf32>
    %190 = vector.extract_strided_slice %189 {offsets = [0, 0], sizes = [1, 32], strides = [1, 1]} : vector<1x128xf32> to vector<1x32xf32>
    %191 = vector.extract_strided_slice %189 {offsets = [0, 32], sizes = [1, 32], strides = [1, 1]} : vector<1x128xf32> to vector<1x32xf32>
    %192 = vector.extract_strided_slice %189 {offsets = [0, 64], sizes = [1, 32], strides = [1, 1]} : vector<1x128xf32> to vector<1x32xf32>
    %cst_54 = arith.constant 2.000000e+00 : f32
    %193 = vector.broadcast %cst_54 : f32 to vector<1x32xf32>
    %194 = arith.mulf %193, %192 : vector<1x32xf32>
    %cst_55 = arith.constant 1.000000e+00 : f32
    %195 = vector.broadcast %cst_55 : f32 to vector<1x32xf32>
    %196 = arith.subf %194, %195 : vector<1x32xf32>
    %197 = vector.extract_strided_slice %189 {offsets = [0, 96], sizes = [1, 32], strides = [1, 1]} : vector<1x128xf32> to vector<1x32xf32>
    %198 = arith.mulf %191, %135 : vector<1x32xf32>
    %199 = arith.mulf %190, %196 : vector<1x32xf32>
    %200 = arith.addf %198, %199 : vector<1x32xf32>
    %201 = math.tanh %200 : vector<1x32xf32>
    %202 = arith.mulf %197, %201 : vector<1x32xf32>
    %c64_56 = arith.constant 64 : index
    %c0_57 = arith.constant 0 : index
    %203 = vector.load %arg1[%c64_56, %c0_57] : memref<264x128xf32, #tpu.memory_space<vmem>>, vector<32x128xf32>
    %cst_58 = arith.constant dense<0.000000e+00> : vector<1x128xf32>
    %204 = tpu.matmul %158, %203, %cst_58 {dimension_numbers = #tpu.dot_dimension_numbers<[1], [0], [0], [1], [0, 0, 1, 1], [], []>} : vector<1x32xf32>, vector<32x128xf32>, vector<1x128xf32> -> vector<1x128xf32>
    %205 = arith.addf %204, %5 : vector<1x128xf32>
    %206 = arith.negf %205 : vector<1x128xf32>
    %207 = math.exp %206 : vector<1x128xf32>
    %cst_59 = arith.constant 1.000000e+00 : f32
    %208 = vector.broadcast %cst_59 : f32 to vector<1x128xf32>
    %209 = arith.addf %208, %207 : vector<1x128xf32>
    %210 = arith.divf %208, %209 : vector<1x128xf32>
    %211 = vector.extract_strided_slice %210 {offsets = [0, 0], sizes = [1, 32], strides = [1, 1]} : vector<1x128xf32> to vector<1x32xf32>
    %212 = vector.extract_strided_slice %210 {offsets = [0, 32], sizes = [1, 32], strides = [1, 1]} : vector<1x128xf32> to vector<1x32xf32>
    %213 = vector.extract_strided_slice %210 {offsets = [0, 64], sizes = [1, 32], strides = [1, 1]} : vector<1x128xf32> to vector<1x32xf32>
    %cst_60 = arith.constant 2.000000e+00 : f32
    %214 = vector.broadcast %cst_60 : f32 to vector<1x32xf32>
    %215 = arith.mulf %214, %213 : vector<1x32xf32>
    %cst_61 = arith.constant 1.000000e+00 : f32
    %216 = vector.broadcast %cst_61 : f32 to vector<1x32xf32>
    %217 = arith.subf %215, %216 : vector<1x32xf32>
    %218 = vector.extract_strided_slice %210 {offsets = [0, 96], sizes = [1, 32], strides = [1, 1]} : vector<1x128xf32> to vector<1x32xf32>
    %219 = arith.mulf %212, %156 : vector<1x32xf32>
    %220 = arith.mulf %211, %217 : vector<1x32xf32>
    %221 = arith.addf %219, %220 : vector<1x32xf32>
    %222 = math.tanh %221 : vector<1x32xf32>
    %223 = arith.mulf %218, %222 : vector<1x32xf32>
    %224 = tpu.concatenate %180, %158 in 1 : vector<1x32xf32>, vector<1x32xf32> -> vector<1x64xf32>
    %c96_62 = arith.constant 96 : index
    %c0_63 = arith.constant 0 : index
    %225 = vector.load %arg1[%c96_62, %c0_63] : memref<264x128xf32, #tpu.memory_space<vmem>>, vector<64x128xf32>
    %cst_64 = arith.constant dense<0.000000e+00> : vector<1x128xf32>
    %226 = tpu.matmul %224, %225, %cst_64 {dimension_numbers = #tpu.dot_dimension_numbers<[1], [0], [0], [1], [0, 0, 1, 1], [], []>} : vector<1x64xf32>, vector<64x128xf32>, vector<1x128xf32> -> vector<1x128xf32>
    %227 = arith.addf %226, %6 : vector<1x128xf32>
    %228 = arith.negf %227 : vector<1x128xf32>
    %229 = math.exp %228 : vector<1x128xf32>
    %cst_65 = arith.constant 1.000000e+00 : f32
    %230 = vector.broadcast %cst_65 : f32 to vector<1x128xf32>
    %231 = arith.addf %230, %229 : vector<1x128xf32>
    %232 = arith.divf %230, %231 : vector<1x128xf32>
    %233 = vector.extract_strided_slice %232 {offsets = [0, 0], sizes = [1, 32], strides = [1, 1]} : vector<1x128xf32> to vector<1x32xf32>
    %234 = vector.extract_strided_slice %232 {offsets = [0, 32], sizes = [1, 32], strides = [1, 1]} : vector<1x128xf32> to vector<1x32xf32>
    %235 = vector.extract_strided_slice %232 {offsets = [0, 64], sizes = [1, 32], strides = [1, 1]} : vector<1x128xf32> to vector<1x32xf32>
    %cst_66 = arith.constant 2.000000e+00 : f32
    %236 = vector.broadcast %cst_66 : f32 to vector<1x32xf32>
    %237 = arith.mulf %236, %235 : vector<1x32xf32>
    %cst_67 = arith.constant 1.000000e+00 : f32
    %238 = vector.broadcast %cst_67 : f32 to vector<1x32xf32>
    %239 = arith.subf %237, %238 : vector<1x32xf32>
    %240 = vector.extract_strided_slice %232 {offsets = [0, 96], sizes = [1, 32], strides = [1, 1]} : vector<1x128xf32> to vector<1x32xf32>
    %241 = arith.mulf %234, %178 : vector<1x32xf32>
    %242 = arith.mulf %233, %239 : vector<1x32xf32>
    %243 = arith.addf %241, %242 : vector<1x32xf32>
    %244 = math.tanh %243 : vector<1x32xf32>
    %245 = arith.mulf %240, %244 : vector<1x32xf32>
    %246 = tpu.concatenate %202, %180 in 1 : vector<1x32xf32>, vector<1x32xf32> -> vector<1x64xf32>
    %c160_68 = arith.constant 160 : index
    %c0_69 = arith.constant 0 : index
    %247 = vector.load %arg1[%c160_68, %c0_69] : memref<264x128xf32, #tpu.memory_space<vmem>>, vector<64x128xf32>
    %cst_70 = arith.constant dense<0.000000e+00> : vector<1x128xf32>
    %248 = tpu.matmul %246, %247, %cst_70 {dimension_numbers = #tpu.dot_dimension_numbers<[1], [0], [0], [1], [0, 0, 1, 1], [], []>} : vector<1x64xf32>, vector<64x128xf32>, vector<1x128xf32> -> vector<1x128xf32>
    %249 = arith.addf %248, %7 : vector<1x128xf32>
    %250 = arith.negf %249 : vector<1x128xf32>
    %251 = math.exp %250 : vector<1x128xf32>
    %cst_71 = arith.constant 1.000000e+00 : f32
    %252 = vector.broadcast %cst_71 : f32 to vector<1x128xf32>
    %253 = arith.addf %252, %251 : vector<1x128xf32>
    %254 = arith.divf %252, %253 : vector<1x128xf32>
    %255 = vector.extract_strided_slice %254 {offsets = [0, 0], sizes = [1, 32], strides = [1, 1]} : vector<1x128xf32> to vector<1x32xf32>
    %256 = vector.extract_strided_slice %254 {offsets = [0, 32], sizes = [1, 32], strides = [1, 1]} : vector<1x128xf32> to vector<1x32xf32>
    %257 = vector.extract_strided_slice %254 {offsets = [0, 64], sizes = [1, 32], strides = [1, 1]} : vector<1x128xf32> to vector<1x32xf32>
    %cst_72 = arith.constant 2.000000e+00 : f32
    %258 = vector.broadcast %cst_72 : f32 to vector<1x32xf32>
    %259 = arith.mulf %258, %257 : vector<1x32xf32>
    %cst_73 = arith.constant 1.000000e+00 : f32
    %260 = vector.broadcast %cst_73 : f32 to vector<1x32xf32>
    %261 = arith.subf %259, %260 : vector<1x32xf32>
    %262 = vector.extract_strided_slice %254 {offsets = [0, 96], sizes = [1, 32], strides = [1, 1]} : vector<1x128xf32> to vector<1x32xf32>
    %263 = arith.mulf %256, %200 : vector<1x32xf32>
    %264 = arith.mulf %255, %261 : vector<1x32xf32>
    %265 = arith.addf %263, %264 : vector<1x32xf32>
    %266 = math.tanh %265 : vector<1x32xf32>
    %267 = arith.mulf %262, %266 : vector<1x32xf32>
    %c64_74 = arith.constant 64 : index
    %c0_75 = arith.constant 0 : index
    %268 = vector.load %arg1[%c64_74, %c0_75] : memref<264x128xf32, #tpu.memory_space<vmem>>, vector<32x128xf32>
    %cst_76 = arith.constant dense<0.000000e+00> : vector<1x128xf32>
    %269 = tpu.matmul %223, %268, %cst_76 {dimension_numbers = #tpu.dot_dimension_numbers<[1], [0], [0], [1], [0, 0, 1, 1], [], []>} : vector<1x32xf32>, vector<32x128xf32>, vector<1x128xf32> -> vector<1x128xf32>
    %270 = arith.addf %269, %5 : vector<1x128xf32>
    %271 = arith.negf %270 : vector<1x128xf32>
    %272 = math.exp %271 : vector<1x128xf32>
    %cst_77 = arith.constant 1.000000e+00 : f32
    %273 = vector.broadcast %cst_77 : f32 to vector<1x128xf32>
    %274 = arith.addf %273, %272 : vector<1x128xf32>
    %275 = arith.divf %273, %274 : vector<1x128xf32>
    %276 = vector.extract_strided_slice %275 {offsets = [0, 0], sizes = [1, 32], strides = [1, 1]} : vector<1x128xf32> to vector<1x32xf32>
    %277 = vector.extract_strided_slice %275 {offsets = [0, 32], sizes = [1, 32], strides = [1, 1]} : vector<1x128xf32> to vector<1x32xf32>
    %278 = vector.extract_strided_slice %275 {offsets = [0, 64], sizes = [1, 32], strides = [1, 1]} : vector<1x128xf32> to vector<1x32xf32>
    %cst_78 = arith.constant 2.000000e+00 : f32
    %279 = vector.broadcast %cst_78 : f32 to vector<1x32xf32>
    %280 = arith.mulf %279, %278 : vector<1x32xf32>
    %cst_79 = arith.constant 1.000000e+00 : f32
    %281 = vector.broadcast %cst_79 : f32 to vector<1x32xf32>
    %282 = arith.subf %280, %281 : vector<1x32xf32>
    %283 = vector.extract_strided_slice %275 {offsets = [0, 96], sizes = [1, 32], strides = [1, 1]} : vector<1x128xf32> to vector<1x32xf32>
    %284 = arith.mulf %277, %221 : vector<1x32xf32>
    %285 = arith.mulf %276, %282 : vector<1x32xf32>
    %286 = arith.addf %284, %285 : vector<1x32xf32>
    %287 = math.tanh %286 : vector<1x32xf32>
    %288 = arith.mulf %283, %287 : vector<1x32xf32>
    %289 = tpu.concatenate %245, %223 in 1 : vector<1x32xf32>, vector<1x32xf32> -> vector<1x64xf32>
    %c96_80 = arith.constant 96 : index
    %c0_81 = arith.constant 0 : index
    %290 = vector.load %arg1[%c96_80, %c0_81] : memref<264x128xf32, #tpu.memory_space<vmem>>, vector<64x128xf32>
    %cst_82 = arith.constant dense<0.000000e+00> : vector<1x128xf32>
    %291 = tpu.matmul %289, %290, %cst_82 {dimension_numbers = #tpu.dot_dimension_numbers<[1], [0], [0], [1], [0, 0, 1, 1], [], []>} : vector<1x64xf32>, vector<64x128xf32>, vector<1x128xf32> -> vector<1x128xf32>
    %292 = arith.addf %291, %6 : vector<1x128xf32>
    %293 = arith.negf %292 : vector<1x128xf32>
    %294 = math.exp %293 : vector<1x128xf32>
    %cst_83 = arith.constant 1.000000e+00 : f32
    %295 = vector.broadcast %cst_83 : f32 to vector<1x128xf32>
    %296 = arith.addf %295, %294 : vector<1x128xf32>
    %297 = arith.divf %295, %296 : vector<1x128xf32>
    %298 = vector.extract_strided_slice %297 {offsets = [0, 0], sizes = [1, 32], strides = [1, 1]} : vector<1x128xf32> to vector<1x32xf32>
    %299 = vector.extract_strided_slice %297 {offsets = [0, 32], sizes = [1, 32], strides = [1, 1]} : vector<1x128xf32> to vector<1x32xf32>
    %300 = vector.extract_strided_slice %297 {offsets = [0, 64], sizes = [1, 32], strides = [1, 1]} : vector<1x128xf32> to vector<1x32xf32>
    %cst_84 = arith.constant 2.000000e+00 : f32
    %301 = vector.broadcast %cst_84 : f32 to vector<1x32xf32>
    %302 = arith.mulf %301, %300 : vector<1x32xf32>
    %cst_85 = arith.constant 1.000000e+00 : f32
    %303 = vector.broadcast %cst_85 : f32 to vector<1x32xf32>
    %304 = arith.subf %302, %303 : vector<1x32xf32>
    %305 = vector.extract_strided_slice %297 {offsets = [0, 96], sizes = [1, 32], strides = [1, 1]} : vector<1x128xf32> to vector<1x32xf32>
    %306 = arith.mulf %299, %243 : vector<1x32xf32>
    %307 = arith.mulf %298, %304 : vector<1x32xf32>
    %308 = arith.addf %306, %307 : vector<1x32xf32>
    %309 = math.tanh %308 : vector<1x32xf32>
    %310 = arith.mulf %305, %309 : vector<1x32xf32>
    %311 = tpu.concatenate %267, %245 in 1 : vector<1x32xf32>, vector<1x32xf32> -> vector<1x64xf32>
    %c160_86 = arith.constant 160 : index
    %c0_87 = arith.constant 0 : index
    %312 = vector.load %arg1[%c160_86, %c0_87] : memref<264x128xf32, #tpu.memory_space<vmem>>, vector<64x128xf32>
    %cst_88 = arith.constant dense<0.000000e+00> : vector<1x128xf32>
    %313 = tpu.matmul %311, %312, %cst_88 {dimension_numbers = #tpu.dot_dimension_numbers<[1], [0], [0], [1], [0, 0, 1, 1], [], []>} : vector<1x64xf32>, vector<64x128xf32>, vector<1x128xf32> -> vector<1x128xf32>
    %314 = arith.addf %313, %7 : vector<1x128xf32>
    %315 = arith.negf %314 : vector<1x128xf32>
    %316 = math.exp %315 : vector<1x128xf32>
    %cst_89 = arith.constant 1.000000e+00 : f32
    %317 = vector.broadcast %cst_89 : f32 to vector<1x128xf32>
    %318 = arith.addf %317, %316 : vector<1x128xf32>
    %319 = arith.divf %317, %318 : vector<1x128xf32>
    %320 = vector.extract_strided_slice %319 {offsets = [0, 0], sizes = [1, 32], strides = [1, 1]} : vector<1x128xf32> to vector<1x32xf32>
    %321 = vector.extract_strided_slice %319 {offsets = [0, 32], sizes = [1, 32], strides = [1, 1]} : vector<1x128xf32> to vector<1x32xf32>
    %322 = vector.extract_strided_slice %319 {offsets = [0, 64], sizes = [1, 32], strides = [1, 1]} : vector<1x128xf32> to vector<1x32xf32>
    %cst_90 = arith.constant 2.000000e+00 : f32
    %323 = vector.broadcast %cst_90 : f32 to vector<1x32xf32>
    %324 = arith.mulf %323, %322 : vector<1x32xf32>
    %cst_91 = arith.constant 1.000000e+00 : f32
    %325 = vector.broadcast %cst_91 : f32 to vector<1x32xf32>
    %326 = arith.subf %324, %325 : vector<1x32xf32>
    %327 = vector.extract_strided_slice %319 {offsets = [0, 96], sizes = [1, 32], strides = [1, 1]} : vector<1x128xf32> to vector<1x32xf32>
    %328 = arith.mulf %321, %265 : vector<1x32xf32>
    %329 = arith.mulf %320, %326 : vector<1x32xf32>
    %330 = arith.addf %328, %329 : vector<1x32xf32>
    %331 = math.tanh %330 : vector<1x32xf32>
    %332 = arith.mulf %327, %331 : vector<1x32xf32>
    %c64_92 = arith.constant 64 : index
    %c0_93 = arith.constant 0 : index
    %333 = vector.load %arg1[%c64_92, %c0_93] : memref<264x128xf32, #tpu.memory_space<vmem>>, vector<32x128xf32>
    %cst_94 = arith.constant dense<0.000000e+00> : vector<1x128xf32>
    %334 = tpu.matmul %288, %333, %cst_94 {dimension_numbers = #tpu.dot_dimension_numbers<[1], [0], [0], [1], [0, 0, 1, 1], [], []>} : vector<1x32xf32>, vector<32x128xf32>, vector<1x128xf32> -> vector<1x128xf32>
    %335 = arith.addf %334, %5 : vector<1x128xf32>
    %336 = arith.negf %335 : vector<1x128xf32>
    %337 = math.exp %336 : vector<1x128xf32>
    %cst_95 = arith.constant 1.000000e+00 : f32
    %338 = vector.broadcast %cst_95 : f32 to vector<1x128xf32>
    %339 = arith.addf %338, %337 : vector<1x128xf32>
    %340 = arith.divf %338, %339 : vector<1x128xf32>
    %341 = vector.extract_strided_slice %340 {offsets = [0, 0], sizes = [1, 32], strides = [1, 1]} : vector<1x128xf32> to vector<1x32xf32>
    %342 = vector.extract_strided_slice %340 {offsets = [0, 32], sizes = [1, 32], strides = [1, 1]} : vector<1x128xf32> to vector<1x32xf32>
    %343 = vector.extract_strided_slice %340 {offsets = [0, 64], sizes = [1, 32], strides = [1, 1]} : vector<1x128xf32> to vector<1x32xf32>
    %cst_96 = arith.constant 2.000000e+00 : f32
    %344 = vector.broadcast %cst_96 : f32 to vector<1x32xf32>
    %345 = arith.mulf %344, %343 : vector<1x32xf32>
    %cst_97 = arith.constant 1.000000e+00 : f32
    %346 = vector.broadcast %cst_97 : f32 to vector<1x32xf32>
    %347 = arith.subf %345, %346 : vector<1x32xf32>
    %348 = vector.extract_strided_slice %340 {offsets = [0, 96], sizes = [1, 32], strides = [1, 1]} : vector<1x128xf32> to vector<1x32xf32>
    %349 = arith.mulf %342, %286 : vector<1x32xf32>
    %350 = arith.mulf %341, %347 : vector<1x32xf32>
    %351 = arith.addf %349, %350 : vector<1x32xf32>
    %352 = math.tanh %351 : vector<1x32xf32>
    %353 = arith.mulf %348, %352 : vector<1x32xf32>
    %354 = tpu.concatenate %310, %288 in 1 : vector<1x32xf32>, vector<1x32xf32> -> vector<1x64xf32>
    %c96_98 = arith.constant 96 : index
    %c0_99 = arith.constant 0 : index
    %355 = vector.load %arg1[%c96_98, %c0_99] : memref<264x128xf32, #tpu.memory_space<vmem>>, vector<64x128xf32>
    %cst_100 = arith.constant dense<0.000000e+00> : vector<1x128xf32>
    %356 = tpu.matmul %354, %355, %cst_100 {dimension_numbers = #tpu.dot_dimension_numbers<[1], [0], [0], [1], [0, 0, 1, 1], [], []>} : vector<1x64xf32>, vector<64x128xf32>, vector<1x128xf32> -> vector<1x128xf32>
    %357 = arith.addf %356, %6 : vector<1x128xf32>
    %358 = arith.negf %357 : vector<1x128xf32>
    %359 = math.exp %358 : vector<1x128xf32>
    %cst_101 = arith.constant 1.000000e+00 : f32
    %360 = vector.broadcast %cst_101 : f32 to vector<1x128xf32>
    %361 = arith.addf %360, %359 : vector<1x128xf32>
    %362 = arith.divf %360, %361 : vector<1x128xf32>
    %363 = vector.extract_strided_slice %362 {offsets = [0, 0], sizes = [1, 32], strides = [1, 1]} : vector<1x128xf32> to vector<1x32xf32>
    %364 = vector.extract_strided_slice %362 {offsets = [0, 32], sizes = [1, 32], strides = [1, 1]} : vector<1x128xf32> to vector<1x32xf32>
    %365 = vector.extract_strided_slice %362 {offsets = [0, 64], sizes = [1, 32], strides = [1, 1]} : vector<1x128xf32> to vector<1x32xf32>
    %cst_102 = arith.constant 2.000000e+00 : f32
    %366 = vector.broadcast %cst_102 : f32 to vector<1x32xf32>
    %367 = arith.mulf %366, %365 : vector<1x32xf32>
    %cst_103 = arith.constant 1.000000e+00 : f32
    %368 = vector.broadcast %cst_103 : f32 to vector<1x32xf32>
    %369 = arith.subf %367, %368 : vector<1x32xf32>
    %370 = vector.extract_strided_slice %362 {offsets = [0, 96], sizes = [1, 32], strides = [1, 1]} : vector<1x128xf32> to vector<1x32xf32>
    %371 = arith.mulf %364, %308 : vector<1x32xf32>
    %372 = arith.mulf %363, %369 : vector<1x32xf32>
    %373 = arith.addf %371, %372 : vector<1x32xf32>
    %374 = math.tanh %373 : vector<1x32xf32>
    %375 = arith.mulf %370, %374 : vector<1x32xf32>
    %376 = tpu.concatenate %332, %310 in 1 : vector<1x32xf32>, vector<1x32xf32> -> vector<1x64xf32>
    %c160_104 = arith.constant 160 : index
    %c0_105 = arith.constant 0 : index
    %377 = vector.load %arg1[%c160_104, %c0_105] : memref<264x128xf32, #tpu.memory_space<vmem>>, vector<64x128xf32>
    %cst_106 = arith.constant dense<0.000000e+00> : vector<1x128xf32>
    %378 = tpu.matmul %376, %377, %cst_106 {dimension_numbers = #tpu.dot_dimension_numbers<[1], [0], [0], [1], [0, 0, 1, 1], [], []>} : vector<1x64xf32>, vector<64x128xf32>, vector<1x128xf32> -> vector<1x128xf32>
    %379 = arith.addf %378, %7 : vector<1x128xf32>
    %380 = arith.negf %379 : vector<1x128xf32>
    %381 = math.exp %380 : vector<1x128xf32>
    %cst_107 = arith.constant 1.000000e+00 : f32
    %382 = vector.broadcast %cst_107 : f32 to vector<1x128xf32>
    %383 = arith.addf %382, %381 : vector<1x128xf32>
    %384 = arith.divf %382, %383 : vector<1x128xf32>
    %385 = vector.extract_strided_slice %384 {offsets = [0, 0], sizes = [1, 32], strides = [1, 1]} : vector<1x128xf32> to vector<1x32xf32>
    %386 = vector.extract_strided_slice %384 {offsets = [0, 32], sizes = [1, 32], strides = [1, 1]} : vector<1x128xf32> to vector<1x32xf32>
    %387 = vector.extract_strided_slice %384 {offsets = [0, 64], sizes = [1, 32], strides = [1, 1]} : vector<1x128xf32> to vector<1x32xf32>
    %cst_108 = arith.constant 2.000000e+00 : f32
    %388 = vector.broadcast %cst_108 : f32 to vector<1x32xf32>
    %389 = arith.mulf %388, %387 : vector<1x32xf32>
    %cst_109 = arith.constant 1.000000e+00 : f32
    %390 = vector.broadcast %cst_109 : f32 to vector<1x32xf32>
    %391 = arith.subf %389, %390 : vector<1x32xf32>
    %392 = vector.extract_strided_slice %384 {offsets = [0, 96], sizes = [1, 32], strides = [1, 1]} : vector<1x128xf32> to vector<1x32xf32>
    %393 = arith.mulf %386, %330 : vector<1x32xf32>
    %394 = arith.mulf %385, %391 : vector<1x32xf32>
    %395 = arith.addf %393, %394 : vector<1x32xf32>
    %396 = math.tanh %395 : vector<1x32xf32>
    %397 = arith.mulf %392, %396 : vector<1x32xf32>
    %c64_110 = arith.constant 64 : index
    %c0_111 = arith.constant 0 : index
    %398 = vector.load %arg1[%c64_110, %c0_111] : memref<264x128xf32, #tpu.memory_space<vmem>>, vector<32x128xf32>
    %cst_112 = arith.constant dense<0.000000e+00> : vector<1x128xf32>
    %399 = tpu.matmul %353, %398, %cst_112 {dimension_numbers = #tpu.dot_dimension_numbers<[1], [0], [0], [1], [0, 0, 1, 1], [], []>} : vector<1x32xf32>, vector<32x128xf32>, vector<1x128xf32> -> vector<1x128xf32>
    %400 = arith.addf %399, %5 : vector<1x128xf32>
    %401 = arith.negf %400 : vector<1x128xf32>
    %402 = math.exp %401 : vector<1x128xf32>
    %cst_113 = arith.constant 1.000000e+00 : f32
    %403 = vector.broadcast %cst_113 : f32 to vector<1x128xf32>
    %404 = arith.addf %403, %402 : vector<1x128xf32>
    %405 = arith.divf %403, %404 : vector<1x128xf32>
    %406 = vector.extract_strided_slice %405 {offsets = [0, 0], sizes = [1, 32], strides = [1, 1]} : vector<1x128xf32> to vector<1x32xf32>
    %407 = vector.extract_strided_slice %405 {offsets = [0, 32], sizes = [1, 32], strides = [1, 1]} : vector<1x128xf32> to vector<1x32xf32>
    %408 = vector.extract_strided_slice %405 {offsets = [0, 64], sizes = [1, 32], strides = [1, 1]} : vector<1x128xf32> to vector<1x32xf32>
    %cst_114 = arith.constant 2.000000e+00 : f32
    %409 = vector.broadcast %cst_114 : f32 to vector<1x32xf32>
    %410 = arith.mulf %409, %408 : vector<1x32xf32>
    %cst_115 = arith.constant 1.000000e+00 : f32
    %411 = vector.broadcast %cst_115 : f32 to vector<1x32xf32>
    %412 = arith.subf %410, %411 : vector<1x32xf32>
    %413 = vector.extract_strided_slice %405 {offsets = [0, 96], sizes = [1, 32], strides = [1, 1]} : vector<1x128xf32> to vector<1x32xf32>
    %414 = arith.mulf %407, %351 : vector<1x32xf32>
    %415 = arith.mulf %406, %412 : vector<1x32xf32>
    %416 = arith.addf %414, %415 : vector<1x32xf32>
    %417 = math.tanh %416 : vector<1x32xf32>
    %418 = arith.mulf %413, %417 : vector<1x32xf32>
    %419 = tpu.concatenate %375, %353 in 1 : vector<1x32xf32>, vector<1x32xf32> -> vector<1x64xf32>
    %c96_116 = arith.constant 96 : index
    %c0_117 = arith.constant 0 : index
    %420 = vector.load %arg1[%c96_116, %c0_117] : memref<264x128xf32, #tpu.memory_space<vmem>>, vector<64x128xf32>
    %cst_118 = arith.constant dense<0.000000e+00> : vector<1x128xf32>
    %421 = tpu.matmul %419, %420, %cst_118 {dimension_numbers = #tpu.dot_dimension_numbers<[1], [0], [0], [1], [0, 0, 1, 1], [], []>} : vector<1x64xf32>, vector<64x128xf32>, vector<1x128xf32> -> vector<1x128xf32>
    %422 = arith.addf %421, %6 : vector<1x128xf32>
    %423 = arith.negf %422 : vector<1x128xf32>
    %424 = math.exp %423 : vector<1x128xf32>
    %cst_119 = arith.constant 1.000000e+00 : f32
    %425 = vector.broadcast %cst_119 : f32 to vector<1x128xf32>
    %426 = arith.addf %425, %424 : vector<1x128xf32>
    %427 = arith.divf %425, %426 : vector<1x128xf32>
    %428 = vector.extract_strided_slice %427 {offsets = [0, 0], sizes = [1, 32], strides = [1, 1]} : vector<1x128xf32> to vector<1x32xf32>
    %429 = vector.extract_strided_slice %427 {offsets = [0, 32], sizes = [1, 32], strides = [1, 1]} : vector<1x128xf32> to vector<1x32xf32>
    %430 = vector.extract_strided_slice %427 {offsets = [0, 64], sizes = [1, 32], strides = [1, 1]} : vector<1x128xf32> to vector<1x32xf32>
    %cst_120 = arith.constant 2.000000e+00 : f32
    %431 = vector.broadcast %cst_120 : f32 to vector<1x32xf32>
    %432 = arith.mulf %431, %430 : vector<1x32xf32>
    %cst_121 = arith.constant 1.000000e+00 : f32
    %433 = vector.broadcast %cst_121 : f32 to vector<1x32xf32>
    %434 = arith.subf %432, %433 : vector<1x32xf32>
    %435 = vector.extract_strided_slice %427 {offsets = [0, 96], sizes = [1, 32], strides = [1, 1]} : vector<1x128xf32> to vector<1x32xf32>
    %436 = arith.mulf %429, %373 : vector<1x32xf32>
    %437 = arith.mulf %428, %434 : vector<1x32xf32>
    %438 = arith.addf %436, %437 : vector<1x32xf32>
    %439 = math.tanh %438 : vector<1x32xf32>
    %440 = arith.mulf %435, %439 : vector<1x32xf32>
    %441 = tpu.concatenate %397, %375 in 1 : vector<1x32xf32>, vector<1x32xf32> -> vector<1x64xf32>
    %c160_122 = arith.constant 160 : index
    %c0_123 = arith.constant 0 : index
    %442 = vector.load %arg1[%c160_122, %c0_123] : memref<264x128xf32, #tpu.memory_space<vmem>>, vector<64x128xf32>
    %cst_124 = arith.constant dense<0.000000e+00> : vector<1x128xf32>
    %443 = tpu.matmul %441, %442, %cst_124 {dimension_numbers = #tpu.dot_dimension_numbers<[1], [0], [0], [1], [0, 0, 1, 1], [], []>} : vector<1x64xf32>, vector<64x128xf32>, vector<1x128xf32> -> vector<1x128xf32>
    %444 = arith.addf %443, %7 : vector<1x128xf32>
    %445 = arith.negf %444 : vector<1x128xf32>
    %446 = math.exp %445 : vector<1x128xf32>
    %cst_125 = arith.constant 1.000000e+00 : f32
    %447 = vector.broadcast %cst_125 : f32 to vector<1x128xf32>
    %448 = arith.addf %447, %446 : vector<1x128xf32>
    %449 = arith.divf %447, %448 : vector<1x128xf32>
    %450 = vector.extract_strided_slice %449 {offsets = [0, 0], sizes = [1, 32], strides = [1, 1]} : vector<1x128xf32> to vector<1x32xf32>
    %451 = vector.extract_strided_slice %449 {offsets = [0, 32], sizes = [1, 32], strides = [1, 1]} : vector<1x128xf32> to vector<1x32xf32>
    %452 = vector.extract_strided_slice %449 {offsets = [0, 64], sizes = [1, 32], strides = [1, 1]} : vector<1x128xf32> to vector<1x32xf32>
    %cst_126 = arith.constant 2.000000e+00 : f32
    %453 = vector.broadcast %cst_126 : f32 to vector<1x32xf32>
    %454 = arith.mulf %453, %452 : vector<1x32xf32>
    %cst_127 = arith.constant 1.000000e+00 : f32
    %455 = vector.broadcast %cst_127 : f32 to vector<1x32xf32>
    %456 = arith.subf %454, %455 : vector<1x32xf32>
    %457 = vector.extract_strided_slice %449 {offsets = [0, 96], sizes = [1, 32], strides = [1, 1]} : vector<1x128xf32> to vector<1x32xf32>
    %458 = arith.mulf %451, %395 : vector<1x32xf32>
    %459 = arith.mulf %450, %456 : vector<1x32xf32>
    %460 = arith.addf %458, %459 : vector<1x32xf32>
    %461 = math.tanh %460 : vector<1x32xf32>
    %462 = arith.mulf %457, %461 : vector<1x32xf32>
    %463 = tpu.concatenate %440, %418 in 1 : vector<1x32xf32>, vector<1x32xf32> -> vector<1x64xf32>
    %c96_128 = arith.constant 96 : index
    %c0_129 = arith.constant 0 : index
    %464 = vector.load %arg1[%c96_128, %c0_129] : memref<264x128xf32, #tpu.memory_space<vmem>>, vector<64x128xf32>
    %cst_130 = arith.constant dense<0.000000e+00> : vector<1x128xf32>
    %465 = tpu.matmul %463, %464, %cst_130 {dimension_numbers = #tpu.dot_dimension_numbers<[1], [0], [0], [1], [0, 0, 1, 1], [], []>} : vector<1x64xf32>, vector<64x128xf32>, vector<1x128xf32> -> vector<1x128xf32>
    %466 = arith.addf %465, %6 : vector<1x128xf32>
    %467 = arith.negf %466 : vector<1x128xf32>
    %468 = math.exp %467 : vector<1x128xf32>
    %cst_131 = arith.constant 1.000000e+00 : f32
    %469 = vector.broadcast %cst_131 : f32 to vector<1x128xf32>
    %470 = arith.addf %469, %468 : vector<1x128xf32>
    %471 = arith.divf %469, %470 : vector<1x128xf32>
    %472 = vector.extract_strided_slice %471 {offsets = [0, 0], sizes = [1, 32], strides = [1, 1]} : vector<1x128xf32> to vector<1x32xf32>
    %473 = vector.extract_strided_slice %471 {offsets = [0, 32], sizes = [1, 32], strides = [1, 1]} : vector<1x128xf32> to vector<1x32xf32>
    %474 = vector.extract_strided_slice %471 {offsets = [0, 64], sizes = [1, 32], strides = [1, 1]} : vector<1x128xf32> to vector<1x32xf32>
    %cst_132 = arith.constant 2.000000e+00 : f32
    %475 = vector.broadcast %cst_132 : f32 to vector<1x32xf32>
    %476 = arith.mulf %475, %474 : vector<1x32xf32>
    %cst_133 = arith.constant 1.000000e+00 : f32
    %477 = vector.broadcast %cst_133 : f32 to vector<1x32xf32>
    %478 = arith.subf %476, %477 : vector<1x32xf32>
    %479 = vector.extract_strided_slice %471 {offsets = [0, 96], sizes = [1, 32], strides = [1, 1]} : vector<1x128xf32> to vector<1x32xf32>
    %480 = arith.mulf %473, %438 : vector<1x32xf32>
    %481 = arith.mulf %472, %478 : vector<1x32xf32>
    %482 = arith.addf %480, %481 : vector<1x32xf32>
    %483 = math.tanh %482 : vector<1x32xf32>
    %484 = arith.mulf %479, %483 : vector<1x32xf32>
    %485 = tpu.concatenate %462, %440 in 1 : vector<1x32xf32>, vector<1x32xf32> -> vector<1x64xf32>
    %c160_134 = arith.constant 160 : index
    %c0_135 = arith.constant 0 : index
    %486 = vector.load %arg1[%c160_134, %c0_135] : memref<264x128xf32, #tpu.memory_space<vmem>>, vector<64x128xf32>
    %cst_136 = arith.constant dense<0.000000e+00> : vector<1x128xf32>
    %487 = tpu.matmul %485, %486, %cst_136 {dimension_numbers = #tpu.dot_dimension_numbers<[1], [0], [0], [1], [0, 0, 1, 1], [], []>} : vector<1x64xf32>, vector<64x128xf32>, vector<1x128xf32> -> vector<1x128xf32>
    %488 = arith.addf %487, %7 : vector<1x128xf32>
    %489 = arith.negf %488 : vector<1x128xf32>
    %490 = math.exp %489 : vector<1x128xf32>
    %cst_137 = arith.constant 1.000000e+00 : f32
    %491 = vector.broadcast %cst_137 : f32 to vector<1x128xf32>
    %492 = arith.addf %491, %490 : vector<1x128xf32>
    %493 = arith.divf %491, %492 : vector<1x128xf32>
    %494 = vector.extract_strided_slice %493 {offsets = [0, 0], sizes = [1, 32], strides = [1, 1]} : vector<1x128xf32> to vector<1x32xf32>
    %495 = vector.extract_strided_slice %493 {offsets = [0, 32], sizes = [1, 32], strides = [1, 1]} : vector<1x128xf32> to vector<1x32xf32>
    %496 = vector.extract_strided_slice %493 {offsets = [0, 64], sizes = [1, 32], strides = [1, 1]} : vector<1x128xf32> to vector<1x32xf32>
    %cst_138 = arith.constant 2.000000e+00 : f32
    %497 = vector.broadcast %cst_138 : f32 to vector<1x32xf32>
    %498 = arith.mulf %497, %496 : vector<1x32xf32>
    %cst_139 = arith.constant 1.000000e+00 : f32
    %499 = vector.broadcast %cst_139 : f32 to vector<1x32xf32>
    %500 = arith.subf %498, %499 : vector<1x32xf32>
    %501 = vector.extract_strided_slice %493 {offsets = [0, 96], sizes = [1, 32], strides = [1, 1]} : vector<1x128xf32> to vector<1x32xf32>
    %502 = arith.mulf %495, %460 : vector<1x32xf32>
    %503 = arith.mulf %494, %500 : vector<1x32xf32>
    %504 = arith.addf %502, %503 : vector<1x32xf32>
    %505 = math.tanh %504 : vector<1x32xf32>
    %506 = arith.mulf %501, %505 : vector<1x32xf32>
    %507 = tpu.concatenate %506, %484 in 1 : vector<1x32xf32>, vector<1x32xf32> -> vector<1x64xf32>
    %c160_140 = arith.constant 160 : index
    %c0_141 = arith.constant 0 : index
    %508 = vector.load %arg1[%c160_140, %c0_141] : memref<264x128xf32, #tpu.memory_space<vmem>>, vector<64x128xf32>
    %cst_142 = arith.constant dense<0.000000e+00> : vector<1x128xf32>
    %509 = tpu.matmul %507, %508, %cst_142 {dimension_numbers = #tpu.dot_dimension_numbers<[1], [0], [0], [1], [0, 0, 1, 1], [], []>} : vector<1x64xf32>, vector<64x128xf32>, vector<1x128xf32> -> vector<1x128xf32>
    %510 = arith.addf %509, %7 : vector<1x128xf32>
    %511 = arith.negf %510 : vector<1x128xf32>
    %512 = math.exp %511 : vector<1x128xf32>
    %cst_143 = arith.constant 1.000000e+00 : f32
    %513 = vector.broadcast %cst_143 : f32 to vector<1x128xf32>
    %514 = arith.addf %513, %512 : vector<1x128xf32>
    %515 = arith.divf %513, %514 : vector<1x128xf32>
    %516 = vector.extract_strided_slice %515 {offsets = [0, 0], sizes = [1, 32], strides = [1, 1]} : vector<1x128xf32> to vector<1x32xf32>
    %517 = vector.extract_strided_slice %515 {offsets = [0, 32], sizes = [1, 32], strides = [1, 1]} : vector<1x128xf32> to vector<1x32xf32>
    %518 = vector.extract_strided_slice %515 {offsets = [0, 64], sizes = [1, 32], strides = [1, 1]} : vector<1x128xf32> to vector<1x32xf32>
    %cst_144 = arith.constant 2.000000e+00 : f32
    %519 = vector.broadcast %cst_144 : f32 to vector<1x32xf32>
    %520 = arith.mulf %519, %518 : vector<1x32xf32>
    %cst_145 = arith.constant 1.000000e+00 : f32
    %521 = vector.broadcast %cst_145 : f32 to vector<1x32xf32>
    %522 = arith.subf %520, %521 : vector<1x32xf32>
    %523 = vector.extract_strided_slice %515 {offsets = [0, 96], sizes = [1, 32], strides = [1, 1]} : vector<1x128xf32> to vector<1x32xf32>
    %524 = arith.mulf %517, %504 : vector<1x32xf32>
    %525 = arith.mulf %516, %522 : vector<1x32xf32>
    %526 = arith.addf %524, %525 : vector<1x32xf32>
    %527 = math.tanh %526 : vector<1x32xf32>
    %528 = arith.mulf %523, %527 : vector<1x32xf32>
    %529 = tpu.concatenate %137, %202, %267, %332, %397, %462, %506, %528 in 0 : vector<1x32xf32>, vector<1x32xf32>, vector<1x32xf32>, vector<1x32xf32>, vector<1x32xf32>, vector<1x32xf32>, vector<1x32xf32>, vector<1x32xf32> -> vector<8x32xf32>
    %c232 = arith.constant 232 : index
    %c0_146 = arith.constant 0 : index
    %530 = vector.load %arg1[%c232, %c0_146] : memref<264x128xf32, #tpu.memory_space<vmem>>, vector<32x128xf32>
    %c227 = arith.constant 227 : index
    %c0_147 = arith.constant 0 : index
    %531 = vector.load %arg1[%c227, %c0_147] : memref<264x128xf32, #tpu.memory_space<vmem>>, vector<1x128xf32>
    %cst_148 = arith.constant dense<0.000000e+00> : vector<8x128xf32>
    %532 = tpu.matmul %529, %530, %cst_148 {dimension_numbers = #tpu.dot_dimension_numbers<[1], [0], [0], [1], [0, 0, 1, 1], [], []>} : vector<8x32xf32>, vector<32x128xf32>, vector<8x128xf32> -> vector<8x128xf32>
    %533 = vector.broadcast %531 : vector<1x128xf32> to vector<8x128xf32>
    %534 = arith.addf %532, %533 : vector<8x128xf32>
    %c0_149 = arith.constant 0 : index
    %c0_150 = arith.constant 0 : index
    %535 = vector.load %arg2[%c0_149, %c0_150] : memref<8x128xf32, #tpu.memory_space<vmem>>, vector<8x128xf32>
    tpu.vector_store %arg2[%c0_149, %c0_150], %534 {strides = array<i32>} : memref<8x128xf32, #tpu.memory_space<vmem>>, vector<8x128xf32>,
    return
  }
}

</mosaic_0001>

<llo_original>
// kernel: tpu_custom_call.1
$region0: #{tpu_custom_call.1}
  #allocation0 [shape = 'u32[]', space=smem, size = 0x4, offset = 0x4, fixed_abs, tag = 'smem constant byte address 0x4 - core index']
  #allocation1 [shape = 'u32[72,128]{1,0:T(1,128)}', space=vmem, size = 0x9000, scoped, tag = 'internal scratch']
  %s0 = inlined_call_operand.hbm [shape: f32[1,64], index: 0, kind: input, shape index: {}]
  %s1 = inlined_call_operand.hbm [shape: f32[264,128], index: 1, kind: input, shape index: {}]
  %s2 = inlined_call_operand.hbm [shape: f32[8,128], index: 2, kind: output, shape index: {}]
  %s3 = sld [smem:[#allocation0]]
  $region26: #{tpu_custom_call.1} parent=0
    _
  %s5 = ssub.s32 1, %s3
  %s6 = scalar_select 0, %s5, %s3
  $region1: #{tpu_custom_call.1} parent=0
    #allocation2 [shape = 'u8[512]{0}', space=vmem, size = 0x400, scoped, tag = 'input window, operand 0, single buffered']
    #allocation3 [shape = 's32[1]{0}', space=sflag, size = 0x4, scoped, tag = 'scoped memory for tpu_custom_call.1']
    #allocation4 [shape = 's32[1]{0}', space=sflag, size = 0x4, scoped, tag = 'scoped memory for tpu_custom_call.1']
    #allocation5 [shape = 'u8[135168]{0}', space=vmem, size = 0x21000, scoped, tag = 'input window, operand 1, single buffered']
    #allocation6 [shape = 's32[1]{0}', space=sflag, size = 0x4, scoped, tag = 'scoped memory for tpu_custom_call.1']
    #allocation7 [shape = 'u8[4096]{0}', space=vmem, size = 0x1000, scoped, tag = 'output window, operand 0, single buffered']
    %7 = vsyncpa [#allocation3], 0
    %8 = vsyncpa [#allocation6], 0
    %9 = vsyncpa [#allocation4], 0
    // Predicated region
    $region2: #{tpu_custom_call.1} parent=1 // pred_check
      _
    $region3: #{tpu_custom_call.1} parent=1 // pred_check_branch
      %11 = sbr.rel (0) target = $region5
    $region4: #{tpu_custom_call.1} parent=1 // pred_region
      %13 = vsyncadd [#allocation3], 0
      %s15 = sshll.u32 %s0, 4
      %s16 = int_to_ptr.hbm [resolvable:$true] %s15
      %s17 = sshll.u32 [#allocation2], 4
      %s18 = int_to_ptr.vmem [resolvable:$true] %s17
      %20 = dma.hbm_to_vmem [thread:$0]  %s16, 16, %s18, [#allocation3]
    $region5: #{tpu_custom_call.1} parent=1 // pred_fallthru
      _
    // Predicated region
    $region6: #{tpu_custom_call.1} parent=1 // pred_check
      _
    $region7: #{tpu_custom_call.1} parent=1 // pred_check_branch
      %22 = sbr.rel (0) target = $region9
    $region8: #{tpu_custom_call.1} parent=1 // pred_region
      %24 = vsyncadd [#allocation6], 0
      %s25 = sshll.u32 %s1, 4
      %s26 = int_to_ptr.hbm [resolvable:$true] %s25
      %s27 = sshll.u32 [#allocation5], 4
      %s28 = int_to_ptr.vmem [resolvable:$true] %s27
      %33 = dma.hbm_to_vmem [thread:$0]  %s26, 4224, %s28, [#allocation6], 128, 128, 8
    $region9: #{tpu_custom_call.1} parent=1 // pred_fallthru
      _
    // Predicated region
    $region10: #{tpu_custom_call.1} parent=1 // pred_check
      _
    $region11: #{tpu_custom_call.1} parent=1 // pred_check_branch
      %35 = sbr.rel (0) target = $region13
    $region12: #{tpu_custom_call.1} parent=1 // pred_region
      %37 = dma.done [#allocation3], 16
    $region13: #{tpu_custom_call.1} parent=1 // pred_fallthru
      _
    // Predicated region
    $region14: #{tpu_custom_call.1} parent=1 // pred_check
      _
    $region15: #{tpu_custom_call.1} parent=1 // pred_check_branch
      %39 = sbr.rel (0) target = $region17
    $region16: #{tpu_custom_call.1} parent=1 // pred_region
      %41 = dma.done [#allocation6], 4224
    $region17: #{tpu_custom_call.1} parent=1 // pred_fallthru
      _
    %v42 = vld [vmem:[#allocation2] sm:$0x1]
    %v43 = vld [vmem:[#allocation5 + $0xe0] sm:$0xf]
    %v44 = vld [vmem:[#allocation5] sm:$0xff]
    %v45 = vld [vmem:[#allocation5 + $0x8] sm:$0xff]
    %v46 = vld [vmem:[#allocation5 + $0x10] sm:$0xff]
    %v47 = vld [vmem:[#allocation5 + $0x18] sm:$0xff]
    %v48 = vld [vmem:[#allocation5 + $0x20] sm:$0xff]
    %v49 = vld [vmem:[#allocation5 + $0x28] sm:$0xff]
    %v50 = vld [vmem:[#allocation5 + $0x30] sm:$0xff]
    %v51 = vld [vmem:[#allocation5 + $0x38] sm:$0xff]
    %vm52 = vcmask 523264
    %v54 = vsel %vm52, %v42, 0
    %56 = vmatpush.msra.mxu0 0.0
    %57 = vmatpush.msra.mxu0 0.0
    %58 = vmatpush.msra.mxu0 0.0
    %59 = vmatpush.msra.mxu0 0.0
    %60 = vmatpush.msra.mxu0 0.0
    %61 = vmatpush.msra.mxu0 0.0
    %62 = vmatpush.msra.mxu0 0.0
    %63 = vmatpush.msra.mxu0 0.0
    %64 = vmatpush.msra.mxu0 %v51
    %65 = vmatpush.msra.mxu0 %v50
    %66 = vmatpush.msra.mxu0 %v49
    %67 = vmatpush.msra.mxu0 %v48
    %68 = vmatpush.msra.mxu0 %v47
    %69 = vmatpush.msra.mxu0 %v46
    %70 = vmatpush.msra.mxu0 %v45
    %71 = vmatpush.msra.mxu0 %v44
    %72 = vmatmul.f32.gmra.mxu0 %v54
    %v73 = vpop.f32.mrf.mxu0
    %v74 = vadd.f32 0.0, %v73
    %75 = vdwg.mxu0
    %v76 = vadd.f32 %v43, %v74
    %v77 = vld [vmem:[#allocation5 + $0x40] sm:$0xff]
    %v78 = vld [vmem:[#allocation5 + $0x48] sm:$0xff]
    %v79 = vld [vmem:[#allocation5 + $0x50] sm:$0xff]
    %v80 = vld [vmem:[#allocation5 + $0x58] sm:$0xff]
    %vm81 = vcmask 261120
    %v83 = vsel %vm81, 0.0, 0
    %85 = vmatpush.msra.mxu0 0.0
    %86 = vmatpush.msra.mxu0 0.0
    %87 = vmatpush.msra.mxu0 0.0
    %88 = vmatpush.msra.mxu0 0.0
    %89 = vmatpush.msra.mxu0 0.0
    %90 = vmatpush.msra.mxu0 0.0
    %91 = vmatpush.msra.mxu0 0.0
    %92 = vmatpush.msra.mxu0 0.0
    %93 = vmatpush.msra.mxu0 0.0
    %94 = vmatpush.msra.mxu0 0.0
    %95 = vmatpush.msra.mxu0 0.0
    %96 = vmatpush.msra.mxu0 0.0
    %97 = vmatpush.msra.mxu0 %v80
    %98 = vmatpush.msra.mxu0 %v79
    %99 = vmatpush.msra.mxu0 %v78
    %100 = vmatpush.msra.mxu0 %v77
    %101 = vmatmul.f32.gmra.mxu0 %v83
    %v102 = vpop.f32.mrf.mxu0
    %v103 = vadd.f32 %v76, %v102
    %104 = vdwg.mxu0
    %v105 = vxor.u32 %v103, 2147483648
    %v106 = vmul.f32 %v105, 1.442695
    %v107 = vpow.pop %v106
    %v108 = vadd.f32 %v107, 1.0
    %v109 = vrcp.pop %v108
    %v110 = vmul.f32 %v108, %v109
    %v111 = vsub.f32 1.0, %v110
    %v112 = vmul.f32 %v109, %v111
    %v113 = vadd.f32 %v109, %v112
    %vm114 = vweird.f32 %v108
    %vm115 = vweird.f32 %v109
    %vm116 = vmor %vm114, %vm115
    %v117 = vsel %vm116, %v109, %v113
    %v118 = vand.u32 2147483647, %v108
    %vm119 = vcmp.eq.f32.partialorder %v118, 8.507059e+37
    %v120 = vand.u32 %v108, 2147483648
    %v121 = vor.u32 1.1754944e-38, %v120
    %v122 = vsel %vm119, %v121, %v117
    %v123 = vmul.f32 1.0, %v122
    %v124 = vmul.f32 %v123, 2.0
    %v125 = vsub.f32 %v124, 1.0
    %v126 = vmul.f32 %v123, 0.0
    %128 = vrot.lane.b32.xlu0 %v125, 64
    %v129 = vpop.permute.xlu0 %128
    %v131 = vmul.f32 %v123, %v129
    %133 = vrot.lane.b32.xlu0 %v131, 32
    %v134 = vpop.permute.xlu0 %133
    %v136 = vadd.f32 %v126, %v134
    %v137 = vtanh.pop %v136
    %139 = vrot.lane.b32.xlu0 %v137, 64
    %v140 = vpop.permute.xlu0 %139
    %v142 = vmul.f32 %v123, %v140
    %144 = vrot.lane.b32.xlu0 %v142, 32
    %v145 = vpop.permute.xlu0 %144
    %v146 = vsel %vm81, %v145, 0
    %148 = vmatpush.msra.mxu0 0.0
    %149 = vmatpush.msra.mxu0 0.0
    %150 = vmatpush.msra.mxu0 0.0
    %151 = vmatpush.msra.mxu0 0.0
    %152 = vmatpush.msra.mxu0 0.0
    %153 = vmatpush.msra.mxu0 0.0
    %154 = vmatpush.msra.mxu0 0.0
    %155 = vmatpush.msra.mxu0 0.0
    %156 = vmatpush.msra.mxu0 0.0
    %157 = vmatpush.msra.mxu0 0.0
    %158 = vmatpush.msra.mxu0 0.0
    %159 = vmatpush.msra.mxu0 0.0
    %160 = vmatpush.msra.mxu0 %v80
    %161 = vmatpush.msra.mxu0 %v79
    %162 = vmatpush.msra.mxu0 %v78
    %163 = vmatpush.msra.mxu0 %v77
    %164 = vmatmul.f32.gmra.mxu0 %v146
    %v165 = vpop.f32.mrf.mxu0
    %v166 = vadd.f32 %v76, %v165
    %167 = vdwg.mxu0
    %v168 = vxor.u32 %v166, 2147483648
    %v169 = vmul.f32 %v168, 1.442695
    %v170 = vpow.pop %v169
    %v171 = vadd.f32 %v170, 1.0
    %v172 = vrcp.pop %v171
    %v173 = vmul.f32 %v171, %v172
    %v174 = vsub.f32 1.0, %v173
    %v175 = vmul.f32 %v172, %v174
    %v176 = vadd.f32 %v172, %v175
    %vm177 = vweird.f32 %v171
    %vm178 = vweird.f32 %v172
    %vm179 = vmor %vm177, %vm178
    %v180 = vsel %vm179, %v172, %v176
    %v181 = vand.u32 2147483647, %v171
    %vm182 = vcmp.eq.f32.partialorder %v181, 8.507059e+37
    %v183 = vand.u32 %v171, 2147483648
    %v184 = vor.u32 1.1754944e-38, %v183
    %v185 = vsel %vm182, %v184, %v180
    %v186 = vmul.f32 1.0, %v185
    %v187 = vmul.f32 %v186, 2.0
    %v188 = vsub.f32 %v187, 1.0
    %v189 = vmul.f32 %v186, %v136
    %191 = vrot.lane.b32.xlu0 %v188, 64
    %v192 = vpop.permute.xlu0 %191
    %v194 = vmul.f32 %v186, %v192
    %196 = vrot.lane.b32.xlu0 %v194, 32
    %v197 = vpop.permute.xlu0 %196
    %v199 = vadd.f32 %v189, %v197
    %v200 = vtanh.pop %v199
    %202 = vrot.lane.b32.xlu0 %v200, 64
    %v203 = vpop.permute.xlu0 %202
    %v205 = vmul.f32 %v186, %v203
    %206 = vrot.lane.b32.xlu0 %v142, 64
    %v207 = vpop.permute.xlu0 %206
    %v209 = vsel %vm81, 0.0, %v207
    %v210 = vld [vmem:[#allocation5 + $0x60] sm:$0xff]
    %v211 = vld [vmem:[#allocation5 + $0x68] sm:$0xff]
    %v212 = vld [vmem:[#allocation5 + $0x70] sm:$0xff]
    %v213 = vld [vmem:[#allocation5 + $0x78] sm:$0xff]
    %v214 = vld [vmem:[#allocation5 + $0x80] sm:$0xff]
    %v215 = vld [vmem:[#allocation5 + $0x88] sm:$0xff]
    %v216 = vld [vmem:[#allocation5 + $0x90] sm:$0xff]
    %v217 = vld [vmem:[#allocation5 + $0x98] sm:$0xff]
    %v219 = vrot.slane %v43, 1
    %v222 = vsel %vm52, %v209, 0
    %224 = vmatpush.msra.mxu0 0.0
    %225 = vmatpush.msra.mxu0 0.0
    %226 = vmatpush.msra.mxu0 0.0
    %227 = vmatpush.msra.mxu0 0.0
    %228 = vmatpush.msra.mxu0 0.0
    %229 = vmatpush.msra.mxu0 0.0
    %230 = vmatpush.msra.mxu0 0.0
    %231 = vmatpush.msra.mxu0 0.0
    %232 = vmatpush.msra.mxu0 %v217
    %233 = vmatpush.msra.mxu0 %v216
    %234 = vmatpush.msra.mxu0 %v215
    %235 = vmatpush.msra.mxu0 %v214
    %236 = vmatpush.msra.mxu0 %v213
    %237 = vmatpush.msra.mxu0 %v212
    %238 = vmatpush.msra.mxu0 %v211
    %239 = vmatpush.msra.mxu0 %v210
    %240 = vmatmul.f32.gmra.mxu0 %v222
    %v241 = vpop.f32.mrf.mxu0
    %v242 = vadd.f32 %v219, %v241
    %243 = vdwg.mxu0
    %v244 = vxor.u32 %v242, 2147483648
    %v245 = vmul.f32 %v244, 1.442695
    %v246 = vpow.pop %v245
    %v247 = vadd.f32 %v246, 1.0
    %v248 = vrcp.pop %v247
    %v249 = vmul.f32 %v247, %v248
    %v250 = vsub.f32 1.0, %v249
    %v251 = vmul.f32 %v248, %v250
    %v252 = vadd.f32 %v248, %v251
    %vm253 = vweird.f32 %v247
    %vm254 = vweird.f32 %v248
    %vm255 = vmor %vm253, %vm254
    %v256 = vsel %vm255, %v248, %v252
    %v257 = vand.u32 2147483647, %v247
    %vm258 = vcmp.eq.f32.partialorder %v257, 8.507059e+37
    %v259 = vand.u32 %v247, 2147483648
    %v260 = vor.u32 1.1754944e-38, %v259
    %v261 = vsel %vm258, %v260, %v256
    %v262 = vmul.f32 1.0, %v261
    %v263 = vmul.f32 %v262, 2.0
    %v264 = vsub.f32 %v263, 1.0
    %v265 = vmul.f32 %v262, 0.0
    %267 = vrot.lane.b32.xlu0 %v264, 64
    %v268 = vpop.permute.xlu0 %267
    %v270 = vmul.f32 %v262, %v268
    %272 = vrot.lane.b32.xlu0 %v270, 32
    %v273 = vpop.permute.xlu0 %272
    %v275 = vadd.f32 %v265, %v273
    %v276 = vtanh.pop %v275
    %278 = vrot.lane.b32.xlu0 %v276, 64
    %v279 = vpop.permute.xlu0 %278
    %v281 = vmul.f32 %v262, %v279
    %283 = vrot.lane.b32.xlu0 %v205, 32
    %v284 = vpop.permute.xlu0 %283
    %v285 = vsel %vm81, %v284, 0
    %287 = vmatpush.msra.mxu0 0.0
    %288 = vmatpush.msra.mxu0 0.0
    %289 = vmatpush.msra.mxu0 0.0
    %290 = vmatpush.msra.mxu0 0.0
    %291 = vmatpush.msra.mxu0 0.0
    %292 = vmatpush.msra.mxu0 0.0
    %293 = vmatpush.msra.mxu0 0.0
    %294 = vmatpush.msra.mxu0 0.0
    %295 = vmatpush.msra.mxu0 0.0
    %296 = vmatpush.msra.mxu0 0.0
    %297 = vmatpush.msra.mxu0 0.0
    %298 = vmatpush.msra.mxu0 0.0
    %299 = vmatpush.msra.mxu0 %v80
    %300 = vmatpush.msra.mxu0 %v79
    %301 = vmatpush.msra.mxu0 %v78
    %302 = vmatpush.msra.mxu0 %v77
    %303 = vmatmul.f32.gmra.mxu0 %v285
    %v304 = vpop.f32.mrf.mxu0
    %v305 = vadd.f32 %v76, %v304
    %306 = vdwg.mxu0
    %v307 = vxor.u32 %v305, 2147483648
    %v308 = vmul.f32 %v307, 1.442695
    %v309 = vpow.pop %v308
    %v310 = vadd.f32 %v309, 1.0
    %v311 = vrcp.pop %v310
    %v312 = vmul.f32 %v310, %v311
    %v313 = vsub.f32 1.0, %v312
    %v314 = vmul.f32 %v311, %v313
    %v315 = vadd.f32 %v311, %v314
    %vm316 = vweird.f32 %v310
    %vm317 = vweird.f32 %v311
    %vm318 = vmor %vm316, %vm317
    %v319 = vsel %vm318, %v311, %v315
    %v320 = vand.u32 2147483647, %v310
    %vm321 = vcmp.eq.f32.partialorder %v320, 8.507059e+37
    %v322 = vand.u32 %v310, 2147483648
    %v323 = vor.u32 1.1754944e-38, %v322
    %v324 = vsel %vm321, %v323, %v319
    %v325 = vmul.f32 1.0, %v324
    %v326 = vmul.f32 %v325, 2.0
    %v327 = vsub.f32 %v326, 1.0
    %v328 = vmul.f32 %v325, %v199
    %330 = vrot.lane.b32.xlu0 %v327, 64
    %v331 = vpop.permute.xlu0 %330
    %v333 = vmul.f32 %v325, %v331
    %335 = vrot.lane.b32.xlu0 %v333, 32
    %v336 = vpop.permute.xlu0 %335
    %v338 = vadd.f32 %v328, %v336
    %v339 = vtanh.pop %v338
    %341 = vrot.lane.b32.xlu0 %v339, 64
    %v342 = vpop.permute.xlu0 %341
    %v344 = vmul.f32 %v325, %v342
    %346 = vrot.lane.b32.xlu0 %v281, 32
    %v347 = vpop.permute.xlu0 %346
    %349 = vrot.lane.b32.xlu0 %v205, 64
    %v350 = vpop.permute.xlu0 %349
    %v352 = vsel %vm81, %v347, %v350
    %v354 = vsel %vm52, %v352, 0
    %356 = vmatpush.msra.mxu0 0.0
    %357 = vmatpush.msra.mxu0 0.0
    %358 = vmatpush.msra.mxu0 0.0
    %359 = vmatpush.msra.mxu0 0.0
    %360 = vmatpush.msra.mxu0 0.0
    %361 = vmatpush.msra.mxu0 0.0
    %362 = vmatpush.msra.mxu0 0.0
    %363 = vmatpush.msra.mxu0 0.0
    %364 = vmatpush.msra.mxu0 %v217
    %365 = vmatpush.msra.mxu0 %v216
    %366 = vmatpush.msra.mxu0 %v215
    %367 = vmatpush.msra.mxu0 %v214
    %368 = vmatpush.msra.mxu0 %v213
    %369 = vmatpush.msra.mxu0 %v212
    %370 = vmatpush.msra.mxu0 %v211
    %371 = vmatpush.msra.mxu0 %v210
    %372 = vmatmul.f32.gmra.mxu0 %v354
    %v373 = vpop.f32.mrf.mxu0
    %v374 = vadd.f32 %v219, %v373
    %375 = vdwg.mxu0
    %v376 = vxor.u32 %v374, 2147483648
    %v377 = vmul.f32 %v376, 1.442695
    %v378 = vpow.pop %v377
    %v379 = vadd.f32 %v378, 1.0
    %v380 = vrcp.pop %v379
    %v381 = vmul.f32 %v379, %v380
    %v382 = vsub.f32 1.0, %v381
    %v383 = vmul.f32 %v380, %v382
    %v384 = vadd.f32 %v380, %v383
    %vm385 = vweird.f32 %v379
    %vm386 = vweird.f32 %v380
    %vm387 = vmor %vm385, %vm386
    %v388 = vsel %vm387, %v380, %v384
    %v389 = vand.u32 2147483647, %v379
    %vm390 = vcmp.eq.f32.partialorder %v389, 8.507059e+37
    %v391 = vand.u32 %v379, 2147483648
    %v392 = vor.u32 1.1754944e-38, %v391
    %v393 = vsel %vm390, %v392, %v388
    %v394 = vmul.f32 1.0, %v393
    %v395 = vmul.f32 %v394, 2.0
    %v396 = vsub.f32 %v395, 1.0
    %v397 = vmul.f32 %v394, %v275
    %399 = vrot.lane.b32.xlu0 %v396, 64
    %v400 = vpop.permute.xlu0 %399
    %v402 = vmul.f32 %v394, %v400
    %404 = vrot.lane.b32.xlu0 %v402, 32
    %v405 = vpop.permute.xlu0 %404
    %v407 = vadd.f32 %v397, %v405
    %v408 = vtanh.pop %v407
    %410 = vrot.lane.b32.xlu0 %v408, 64
    %v411 = vpop.permute.xlu0 %410
    %v413 = vmul.f32 %v394, %v411
    %414 = vrot.lane.b32.xlu0 %v281, 64
    %v415 = vpop.permute.xlu0 %414
    %v417 = vsel %vm81, 0.0, %v415
    %v418 = vld [vmem:[#allocation5 + $0xa0] sm:$0xff]
    %v419 = vld [vmem:[#allocation5 + $0xa8] sm:$0xff]
    %v420 = vld [vmem:[#allocation5 + $0xb0] sm:$0xff]
    %v421 = vld [vmem:[#allocation5 + $0xb8] sm:$0xff]
    %v422 = vld [vmem:[#allocation5 + $0xc0] sm:$0xff]
    %v423 = vld [vmem:[#allocation5 + $0xc8] sm:$0xff]
    %v424 = vld [vmem:[#allocation5 + $0xd0] sm:$0xff]
    %v425 = vld [vmem:[#allocation5 + $0xd8] sm:$0xff]
    %v426 = vrot.slane %v43, 2
    %v429 = vsel %vm52, %v417, 0
    %431 = vmatpush.msra.mxu0 0.0
    %432 = vmatpush.msra.mxu0 0.0
    %433 = vmatpush.msra.mxu0 0.0
    %434 = vmatpush.msra.mxu0 0.0
    %435 = vmatpush.msra.mxu0 0.0
    %436 = vmatpush.msra.mxu0 0.0
    %437 = vmatpush.msra.mxu0 0.0
    %438 = vmatpush.msra.mxu0 0.0
    %439 = vmatpush.msra.mxu0 %v425
    %440 = vmatpush.msra.mxu0 %v424
    %441 = vmatpush.msra.mxu0 %v423
    %442 = vmatpush.msra.mxu0 %v422
    %443 = vmatpush.msra.mxu0 %v421
    %444 = vmatpush.msra.mxu0 %v420
    %445 = vmatpush.msra.mxu0 %v419
    %446 = vmatpush.msra.mxu0 %v418
    %447 = vmatmul.f32.gmra.mxu0 %v429
    %v448 = vpop.f32.mrf.mxu0
    %v449 = vadd.f32 %v426, %v448
    %450 = vdwg.mxu0
    %v451 = vxor.u32 %v449, 2147483648
    %v452 = vmul.f32 %v451, 1.442695
    %v453 = vpow.pop %v452
    %v454 = vadd.f32 %v453, 1.0
    %v455 = vrcp.pop %v454
    %v456 = vmul.f32 %v454, %v455
    %v457 = vsub.f32 1.0, %v456
    %v458 = vmul.f32 %v455, %v457
    %v459 = vadd.f32 %v455, %v458
    %vm460 = vweird.f32 %v454
    %vm461 = vweird.f32 %v455
    %vm462 = vmor %vm460, %vm461
    %v463 = vsel %vm462, %v455, %v459
    %v464 = vand.u32 2147483647, %v454
    %vm465 = vcmp.eq.f32.partialorder %v464, 8.507059e+37
    %v466 = vand.u32 %v454, 2147483648
    %v467 = vor.u32 1.1754944e-38, %v466
    %v468 = vsel %vm465, %v467, %v463
    %v469 = vmul.f32 1.0, %v468
    %v470 = vmul.f32 %v469, 2.0
    %v471 = vsub.f32 %v470, 1.0
    %v472 = vmul.f32 %v469, 0.0
    %474 = vrot.lane.b32.xlu0 %v471, 64
    %v475 = vpop.permute.xlu0 %474
    %v477 = vmul.f32 %v469, %v475
    %479 = vrot.lane.b32.xlu0 %v477, 32
    %v480 = vpop.permute.xlu0 %479
    %v482 = vadd.f32 %v472, %v480
    %v483 = vtanh.pop %v482
    %485 = vrot.lane.b32.xlu0 %v483, 64
    %v486 = vpop.permute.xlu0 %485
    %v488 = vmul.f32 %v469, %v486
    %490 = vrot.lane.b32.xlu0 %v344, 32
    %v491 = vpop.permute.xlu0 %490
    %v492 = vsel %vm81, %v491, 0
    %494 = vmatpush.msra.mxu0 0.0
    %495 = vmatpush.msra.mxu0 0.0
    %496 = vmatpush.msra.mxu0 0.0
    %497 = vmatpush.msra.mxu0 0.0
    %498 = vmatpush.msra.mxu0 0.0
    %499 = vmatpush.msra.mxu0 0.0
    %500 = vmatpush.msra.mxu0 0.0
    %501 = vmatpush.msra.mxu0 0.0
    %502 = vmatpush.msra.mxu0 0.0
    %503 = vmatpush.msra.mxu0 0.0
    %504 = vmatpush.msra.mxu0 0.0
    %505 = vmatpush.msra.mxu0 0.0
    %506 = vmatpush.msra.mxu0 %v80
    %507 = vmatpush.msra.mxu0 %v79
    %508 = vmatpush.msra.mxu0 %v78
    %509 = vmatpush.msra.mxu0 %v77
    %510 = vmatmul.f32.gmra.mxu0 %v492
    %v511 = vpop.f32.mrf.mxu0
    %v512 = vadd.f32 %v76, %v511
    %513 = vdwg.mxu0
    %v514 = vxor.u32 %v512, 2147483648
    %v515 = vmul.f32 %v514, 1.442695
    %v516 = vpow.pop %v515
    %v517 = vadd.f32 %v516, 1.0
    %v518 = vrcp.pop %v517
    %v519 = vmul.f32 %v517, %v518
    %v520 = vsub.f32 1.0, %v519
    %v521 = vmul.f32 %v518, %v520
    %v522 = vadd.f32 %v518, %v521
    %vm523 = vweird.f32 %v517
    %vm524 = vweird.f32 %v518
    %vm525 = vmor %vm523, %vm524
    %v526 = vsel %vm525, %v518, %v522
    %v527 = vand.u32 2147483647, %v517
    %vm528 = vcmp.eq.f32.partialorder %v527, 8.507059e+37
    %v529 = vand.u32 %v517, 2147483648
    %v530 = vor.u32 1.1754944e-38, %v529
    %v531 = vsel %vm528, %v530, %v526
    %v532 = vmul.f32 1.0, %v531
    %v533 = vmul.f32 %v532, 2.0
    %v534 = vsub.f32 %v533, 1.0
    %v535 = vmul.f32 %v532, %v338
    %537 = vrot.lane.b32.xlu0 %v534, 64
    %v538 = vpop.permute.xlu0 %537
    %v540 = vmul.f32 %v532, %v538
    %542 = vrot.lane.b32.xlu0 %v540, 32
    %v543 = vpop.permute.xlu0 %542
    %v545 = vadd.f32 %v535, %v543
    %v546 = vtanh.pop %v545
    %548 = vrot.lane.b32.xlu0 %v546, 64
    %v549 = vpop.permute.xlu0 %548
    %v551 = vmul.f32 %v532, %v549
    %553 = vrot.lane.b32.xlu0 %v413, 32
    %v554 = vpop.permute.xlu0 %553
    %556 = vrot.lane.b32.xlu0 %v344, 64
    %v557 = vpop.permute.xlu0 %556
    %v559 = vsel %vm81, %v554, %v557
    %v561 = vsel %vm52, %v559, 0
    %563 = vmatpush.msra.mxu0 0.0
    %564 = vmatpush.msra.mxu0 0.0
    %565 = vmatpush.msra.mxu0 0.0
    %566 = vmatpush.msra.mxu0 0.0
    %567 = vmatpush.msra.mxu0 0.0
    %568 = vmatpush.msra.mxu0 0.0
    %569 = vmatpush.msra.mxu0 0.0
    %570 = vmatpush.msra.mxu0 0.0
    %571 = vmatpush.msra.mxu0 %v217
    %572 = vmatpush.msra.mxu0 %v216
    %573 = vmatpush.msra.mxu0 %v215
    %574 = vmatpush.msra.mxu0 %v214
    %575 = vmatpush.msra.mxu0 %v213
    %576 = vmatpush.msra.mxu0 %v212
    %577 = vmatpush.msra.mxu0 %v211
    %578 = vmatpush.msra.mxu0 %v210
    %579 = vmatmul.f32.gmra.mxu0 %v561
    %v580 = vpop.f32.mrf.mxu0
    %v581 = vadd.f32 %v219, %v580
    %582 = vdwg.mxu0
    %v583 = vxor.u32 %v581, 2147483648
    %v584 = vmul.f32 %v583, 1.442695
    %v585 = vpow.pop %v584
    %v586 = vadd.f32 %v585, 1.0
    %v587 = vrcp.pop %v586
    %v588 = vmul.f32 %v586, %v587
    %v589 = vsub.f32 1.0, %v588
    %v590 = vmul.f32 %v587, %v589
    %v591 = vadd.f32 %v587, %v590
    %vm592 = vweird.f32 %v586
    %vm593 = vweird.f32 %v587
    %vm594 = vmor %vm592, %vm593
    %v595 = vsel %vm594, %v587, %v591
    %v596 = vand.u32 2147483647, %v586
    %vm597 = vcmp.eq.f32.partialorder %v596, 8.507059e+37
    %v598 = vand.u32 %v586, 2147483648
    %v599 = vor.u32 1.1754944e-38, %v598
    %v600 = vsel %vm597, %v599, %v595
    %v601 = vmul.f32 1.0, %v600
    %v602 = vmul.f32 %v601, 2.0
    %v603 = vsub.f32 %v602, 1.0
    %v604 = vmul.f32 %v601, %v407
    %606 = vrot.lane.b32.xlu0 %v603, 64
    %v607 = vpop.permute.xlu0 %606
    %v609 = vmul.f32 %v601, %v607
    %611 = vrot.lane.b32.xlu0 %v609, 32
    %v612 = vpop.permute.xlu0 %611
    %v614 = vadd.f32 %v604, %v612
    %v615 = vtanh.pop %v614
    %617 = vrot.lane.b32.xlu0 %v615, 64
    %v618 = vpop.permute.xlu0 %617
    %v620 = vmul.f32 %v601, %v618
    %622 = vrot.lane.b32.xlu0 %v488, 32
    %v623 = vpop.permute.xlu0 %622
    %625 = vrot.lane.b32.xlu0 %v413, 64
    %v626 = vpop.permute.xlu0 %625
    %v628 = vsel %vm81, %v623, %v626
    %v630 = vsel %vm52, %v628, 0
    %632 = vmatpush.msra.mxu0 0.0
    %633 = vmatpush.msra.mxu0 0.0
    %634 = vmatpush.msra.mxu0 0.0
    %635 = vmatpush.msra.mxu0 0.0
    %636 = vmatpush.msra.mxu0 0.0
    %637 = vmatpush.msra.mxu0 0.0
    %638 = vmatpush.msra.mxu0 0.0
    %639 = vmatpush.msra.mxu0 0.0
    %640 = vmatpush.msra.mxu0 %v425
    %641 = vmatpush.msra.mxu0 %v424
    %642 = vmatpush.msra.mxu0 %v423
    %643 = vmatpush.msra.mxu0 %v422
    %644 = vmatpush.msra.mxu0 %v421
    %645 = vmatpush.msra.mxu0 %v420
    %646 = vmatpush.msra.mxu0 %v419
    %647 = vmatpush.msra.mxu0 %v418
    %648 = vmatmul.f32.gmra.mxu0 %v630
    %v649 = vpop.f32.mrf.mxu0
    %v650 = vadd.f32 %v426, %v649
    %651 = vdwg.mxu0
    %v652 = vxor.u32 %v650, 2147483648
    %v653 = vmul.f32 %v652, 1.442695
    %v654 = vpow.pop %v653
    %v655 = vadd.f32 %v654, 1.0
    %v656 = vrcp.pop %v655
    %v657 = vmul.f32 %v655, %v656
    %v658 = vsub.f32 1.0, %v657
    %v659 = vmul.f32 %v656, %v658
    %v660 = vadd.f32 %v656, %v659
    %vm661 = vweird.f32 %v655
    %vm662 = vweird.f32 %v656
    %vm663 = vmor %vm661, %vm662
    %v664 = vsel %vm663, %v656, %v660
    %v665 = vand.u32 2147483647, %v655
    %vm666 = vcmp.eq.f32.partialorder %v665, 8.507059e+37
    %v667 = vand.u32 %v655, 2147483648
    %v668 = vor.u32 1.1754944e-38, %v667
    %v669 = vsel %vm666, %v668, %v664
    %v670 = vmul.f32 1.0, %v669
    %v671 = vmul.f32 %v670, 2.0
    %v672 = vsub.f32 %v671, 1.0
    %v673 = vmul.f32 %v670, %v482
    %675 = vrot.lane.b32.xlu0 %v672, 64
    %v676 = vpop.permute.xlu0 %675
    %v678 = vmul.f32 %v670, %v676
    %680 = vrot.lane.b32.xlu0 %v678, 32
    %v681 = vpop.permute.xlu0 %680
    %v683 = vadd.f32 %v673, %v681
    %v684 = vtanh.pop %v683
    %686 = vrot.lane.b32.xlu0 %v684, 64
    %v687 = vpop.permute.xlu0 %686
    %v689 = vmul.f32 %v670, %v687
    %691 = vrot.lane.b32.xlu0 %v551, 32
    %v692 = vpop.permute.xlu0 %691
    %v693 = vsel %vm81, %v692, 0
    %695 = vmatpush.msra.mxu0 0.0
    %696 = vmatpush.msra.mxu0 0.0
    %697 = vmatpush.msra.mxu0 0.0
    %698 = vmatpush.msra.mxu0 0.0
    %699 = vmatpush.msra.mxu0 0.0
    %700 = vmatpush.msra.mxu0 0.0
    %701 = vmatpush.msra.mxu0 0.0
    %702 = vmatpush.msra.mxu0 0.0
    %703 = vmatpush.msra.mxu0 0.0
    %704 = vmatpush.msra.mxu0 0.0
    %705 = vmatpush.msra.mxu0 0.0
    %706 = vmatpush.msra.mxu0 0.0
    %707 = vmatpush.msra.mxu0 %v80
    %708 = vmatpush.msra.mxu0 %v79
    %709 = vmatpush.msra.mxu0 %v78
    %710 = vmatpush.msra.mxu0 %v77
    %711 = vmatmul.f32.gmra.mxu0 %v693
    %v712 = vpop.f32.mrf.mxu0
    %v713 = vadd.f32 %v76, %v712
    %714 = vdwg.mxu0
    %v715 = vxor.u32 %v713, 2147483648
    %v716 = vmul.f32 %v715, 1.442695
    %v717 = vpow.pop %v716
    %v718 = vadd.f32 %v717, 1.0
    %v719 = vrcp.pop %v718
    %v720 = vmul.f32 %v718, %v719
    %v721 = vsub.f32 1.0, %v720
    %v722 = vmul.f32 %v719, %v721
    %v723 = vadd.f32 %v719, %v722
    %vm724 = vweird.f32 %v718
    %vm725 = vweird.f32 %v719
    %vm726 = vmor %vm724, %vm725
    %v727 = vsel %vm726, %v719, %v723
    %v728 = vand.u32 2147483647, %v718
    %vm729 = vcmp.eq.f32.partialorder %v728, 8.507059e+37
    %v730 = vand.u32 %v718, 2147483648
    %v731 = vor.u32 1.1754944e-38, %v730
    %v732 = vsel %vm729, %v731, %v727
    %v733 = vmul.f32 1.0, %v732
    %v734 = vmul.f32 %v733, 2.0
    %v735 = vsub.f32 %v734, 1.0
    %v736 = vmul.f32 %v733, %v545
    %738 = vrot.lane.b32.xlu0 %v735, 64
    %v739 = vpop.permute.xlu0 %738
    %v741 = vmul.f32 %v733, %v739
    %743 = vrot.lane.b32.xlu0 %v741, 32
    %v744 = vpop.permute.xlu0 %743
    %v746 = vadd.f32 %v736, %v744
    %v747 = vtanh.pop %v746
    %749 = vrot.lane.b32.xlu0 %v747, 64
    %v750 = vpop.permute.xlu0 %749
    %v752 = vmul.f32 %v733, %v750
    %754 = vrot.lane.b32.xlu0 %v620, 32
    %v755 = vpop.permute.xlu0 %754
    %757 = vrot.lane.b32.xlu0 %v551, 64
    %v758 = vpop.permute.xlu0 %757
    %v760 = vsel %vm81, %v755, %v758
    %v762 = vsel %vm52, %v760, 0
    %764 = vmatpush.msra.mxu0 0.0
    %765 = vmatpush.msra.mxu0 0.0
    %766 = vmatpush.msra.mxu0 0.0
    %767 = vmatpush.msra.mxu0 0.0
    %768 = vmatpush.msra.mxu0 0.0
    %769 = vmatpush.msra.mxu0 0.0
    %770 = vmatpush.msra.mxu0 0.0
    %771 = vmatpush.msra.mxu0 0.0
    %772 = vmatpush.msra.mxu0 %v217
    %773 = vmatpush.msra.mxu0 %v216
    %774 = vmatpush.msra.mxu0 %v215
    %775 = vmatpush.msra.mxu0 %v214
    %776 = vmatpush.msra.mxu0 %v213
    %777 = vmatpush.msra.mxu0 %v212
    %778 = vmatpush.msra.mxu0 %v211
    %779 = vmatpush.msra.mxu0 %v210
    %780 = vmatmul.f32.gmra.mxu0 %v762
    %v781 = vpop.f32.mrf.mxu0
    %v782 = vadd.f32 %v219, %v781
    %783 = vdwg.mxu0
    %v784 = vxor.u32 %v782, 2147483648
    %v785 = vmul.f32 %v784, 1.442695
    %v786 = vpow.pop %v785
    %v787 = vadd.f32 %v786, 1.0
    %v788 = vrcp.pop %v787
    %v789 = vmul.f32 %v787, %v788
    %v790 = vsub.f32 1.0, %v789
    %v791 = vmul.f32 %v788, %v790
    %v792 = vadd.f32 %v788, %v791
    %vm793 = vweird.f32 %v787
    %vm794 = vweird.f32 %v788
    %vm795 = vmor %vm793, %vm794
    %v796 = vsel %vm795, %v788, %v792
    %v797 = vand.u32 2147483647, %v787
    %vm798 = vcmp.eq.f32.partialorder %v797, 8.507059e+37
    %v799 = vand.u32 %v787, 2147483648
    %v800 = vor.u32 1.1754944e-38, %v799
    %v801 = vsel %vm798, %v800, %v796
    %v802 = vmul.f32 1.0, %v801
    %v803 = vmul.f32 %v802, 2.0
    %v804 = vsub.f32 %v803, 1.0
    %v805 = vmul.f32 %v802, %v614
    %807 = vrot.lane.b32.xlu0 %v804, 64
    %v808 = vpop.permute.xlu0 %807
    %v810 = vmul.f32 %v802, %v808
    %812 = vrot.lane.b32.xlu0 %v810, 32
    %v813 = vpop.permute.xlu0 %812
    %v815 = vadd.f32 %v805, %v813
    %v816 = vtanh.pop %v815
    %818 = vrot.lane.b32.xlu0 %v816, 64
    %v819 = vpop.permute.xlu0 %818
    %v821 = vmul.f32 %v802, %v819
    %823 = vrot.lane.b32.xlu0 %v689, 32
    %v824 = vpop.permute.xlu0 %823
    %826 = vrot.lane.b32.xlu0 %v620, 64
    %v827 = vpop.permute.xlu0 %826
    %v829 = vsel %vm81, %v824, %v827
    %v831 = vsel %vm52, %v829, 0
    %833 = vmatpush.msra.mxu0 0.0
    %834 = vmatpush.msra.mxu0 0.0
    %835 = vmatpush.msra.mxu0 0.0
    %836 = vmatpush.msra.mxu0 0.0
    %837 = vmatpush.msra.mxu0 0.0
    %838 = vmatpush.msra.mxu0 0.0
    %839 = vmatpush.msra.mxu0 0.0
    %840 = vmatpush.msra.mxu0 0.0
    %841 = vmatpush.msra.mxu0 %v425
    %842 = vmatpush.msra.mxu0 %v424
    %843 = vmatpush.msra.mxu0 %v423
    %844 = vmatpush.msra.mxu0 %v422
    %845 = vmatpush.msra.mxu0 %v421
    %846 = vmatpush.msra.mxu0 %v420
    %847 = vmatpush.msra.mxu0 %v419
    %848 = vmatpush.msra.mxu0 %v418
    %849 = vmatmul.f32.gmra.mxu0 %v831
    %v850 = vpop.f32.mrf.mxu0
    %v851 = vadd.f32 %v426, %v850
    %852 = vdwg.mxu0
    %v853 = vxor.u32 %v851, 2147483648
    %v854 = vmul.f32 %v853, 1.442695
    %v855 = vpow.pop %v854
    %v856 = vadd.f32 %v855, 1.0
    %v857 = vrcp.pop %v856
    %v858 = vmul.f32 %v856, %v857
    %v859 = vsub.f32 1.0, %v858
    %v860 = vmul.f32 %v857, %v859
    %v861 = vadd.f32 %v857, %v860
    %vm862 = vweird.f32 %v856
    %vm863 = vweird.f32 %v857
    %vm864 = vmor %vm862, %vm863
    %v865 = vsel %vm864, %v857, %v861
    %v866 = vand.u32 2147483647, %v856
    %vm867 = vcmp.eq.f32.partialorder %v866, 8.507059e+37
    %v868 = vand.u32 %v856, 2147483648
    %v869 = vor.u32 1.1754944e-38, %v868
    %v870 = vsel %vm867, %v869, %v865
    %v871 = vmul.f32 1.0, %v870
    %v872 = vmul.f32 %v871, 2.0
    %v873 = vsub.f32 %v872, 1.0
    %v874 = vmul.f32 %v871, %v683
    %876 = vrot.lane.b32.xlu0 %v873, 64
    %v877 = vpop.permute.xlu0 %876
    %v879 = vmul.f32 %v871, %v877
    %881 = vrot.lane.b32.xlu0 %v879, 32
    %v882 = vpop.permute.xlu0 %881
    %v884 = vadd.f32 %v874, %v882
    %v885 = vtanh.pop %v884
    %887 = vrot.lane.b32.xlu0 %v885, 64
    %v888 = vpop.permute.xlu0 %887
    %v890 = vmul.f32 %v871, %v888
    %892 = vrot.lane.b32.xlu0 %v752, 32
    %v893 = vpop.permute.xlu0 %892
    %v894 = vsel %vm81, %v893, 0
    %896 = vmatpush.msra.mxu0 0.0
    %897 = vmatpush.msra.mxu0 0.0
    %898 = vmatpush.msra.mxu0 0.0
    %899 = vmatpush.msra.mxu0 0.0
    %900 = vmatpush.msra.mxu0 0.0
    %901 = vmatpush.msra.mxu0 0.0
    %902 = vmatpush.msra.mxu0 0.0
    %903 = vmatpush.msra.mxu0 0.0
    %904 = vmatpush.msra.mxu0 0.0
    %905 = vmatpush.msra.mxu0 0.0
    %906 = vmatpush.msra.mxu0 0.0
    %907 = vmatpush.msra.mxu0 0.0
    %908 = vmatpush.msra.mxu0 %v80
    %909 = vmatpush.msra.mxu0 %v79
    %910 = vmatpush.msra.mxu0 %v78
    %911 = vmatpush.msra.mxu0 %v77
    %912 = vmatmul.f32.gmra.mxu0 %v894
    %v913 = vpop.f32.mrf.mxu0
    %v914 = vadd.f32 %v76, %v913
    %915 = vdwg.mxu0
    %v916 = vxor.u32 %v914, 2147483648
    %v917 = vmul.f32 %v916, 1.442695
    %v918 = vpow.pop %v917
    %v919 = vadd.f32 %v918, 1.0
    %v920 = vrcp.pop %v919
    %v921 = vmul.f32 %v919, %v920
    %v922 = vsub.f32 1.0, %v921
    %v923 = vmul.f32 %v920, %v922
    %v924 = vadd.f32 %v920, %v923
    %vm925 = vweird.f32 %v919
    %vm926 = vweird.f32 %v920
    %vm927 = vmor %vm925, %vm926
    %v928 = vsel %vm927, %v920, %v924
    %v929 = vand.u32 2147483647, %v919
    %vm930 = vcmp.eq.f32.partialorder %v929, 8.507059e+37
    %v931 = vand.u32 %v919, 2147483648
    %v932 = vor.u32 1.1754944e-38, %v931
    %v933 = vsel %vm930, %v932, %v928
    %v934 = vmul.f32 1.0, %v933
    %v935 = vmul.f32 %v934, 2.0
    %v936 = vsub.f32 %v935, 1.0
    %v937 = vmul.f32 %v934, %v746
    %939 = vrot.lane.b32.xlu0 %v936, 64
    %v940 = vpop.permute.xlu0 %939
    %v942 = vmul.f32 %v934, %v940
    %944 = vrot.lane.b32.xlu0 %v942, 32
    %v945 = vpop.permute.xlu0 %944
    %v947 = vadd.f32 %v937, %v945
    %v948 = vtanh.pop %v947
    %950 = vrot.lane.b32.xlu0 %v948, 64
    %v951 = vpop.permute.xlu0 %950
    %v953 = vmul.f32 %v934, %v951
    %955 = vrot.lane.b32.xlu0 %v821, 32
    %v956 = vpop.permute.xlu0 %955
    %958 = vrot.lane.b32.xlu0 %v752, 64
    %v959 = vpop.permute.xlu0 %958
    %v961 = vsel %vm81, %v956, %v959
    %v963 = vsel %vm52, %v961, 0
    %965 = vmatpush.msra.mxu0 0.0
    %966 = vmatpush.msra.mxu0 0.0
    %967 = vmatpush.msra.mxu0 0.0
    %968 = vmatpush.msra.mxu0 0.0
    %969 = vmatpush.msra.mxu0 0.0
    %970 = vmatpush.msra.mxu0 0.0
    %971 = vmatpush.msra.mxu0 0.0
    %972 = vmatpush.msra.mxu0 0.0
    %973 = vmatpush.msra.mxu0 %v217
    %974 = vmatpush.msra.mxu0 %v216
    %975 = vmatpush.msra.mxu0 %v215
    %976 = vmatpush.msra.mxu0 %v214
    %977 = vmatpush.msra.mxu0 %v213
    %978 = vmatpush.msra.mxu0 %v212
    %979 = vmatpush.msra.mxu0 %v211
    %980 = vmatpush.msra.mxu0 %v210
    %981 = vmatmul.f32.gmra.mxu0 %v963
    %v982 = vpop.f32.mrf.mxu0
    %v983 = vadd.f32 %v219, %v982
    %984 = vdwg.mxu0
    %v985 = vxor.u32 %v983, 2147483648
    %v986 = vmul.f32 %v985, 1.442695
    %v987 = vpow.pop %v986
    %v988 = vadd.f32 %v987, 1.0
    %v989 = vrcp.pop %v988
    %v990 = vmul.f32 %v988, %v989
    %v991 = vsub.f32 1.0, %v990
    %v992 = vmul.f32 %v989, %v991
    %v993 = vadd.f32 %v989, %v992
    %vm994 = vweird.f32 %v988
    %vm995 = vweird.f32 %v989
    %vm996 = vmor %vm994, %vm995
    %v997 = vsel %vm996, %v989, %v993
    %v998 = vand.u32 2147483647, %v988
    %vm999 = vcmp.eq.f32.partialorder %v998, 8.507059e+37
    %v1000 = vand.u32 %v988, 2147483648
    %v1001 = vor.u32 1.1754944e-38, %v1000
    %v1002 = vsel %vm999, %v1001, %v997
    %v1003 = vmul.f32 1.0, %v1002
    %v1004 = vmul.f32 %v1003, 2.0
    %v1005 = vsub.f32 %v1004, 1.0
    %v1006 = vmul.f32 %v1003, %v815
    %1008 = vrot.lane.b32.xlu0 %v1005, 64
    %v1009 = vpop.permute.xlu0 %1008
    %v1011 = vmul.f32 %v1003, %v1009
    %1013 = vrot.lane.b32.xlu0 %v1011, 32
    %v1014 = vpop.permute.xlu0 %1013
    %v1016 = vadd.f32 %v1006, %v1014
    %v1017 = vtanh.pop %v1016
    %1019 = vrot.lane.b32.xlu0 %v1017, 64
    %v1020 = vpop.permute.xlu0 %1019
    %v1022 = vmul.f32 %v1003, %v1020
    %1024 = vrot.lane.b32.xlu0 %v890, 32
    %v1025 = vpop.permute.xlu0 %1024
    %1027 = vrot.lane.b32.xlu0 %v821, 64
    %v1028 = vpop.permute.xlu0 %1027
    %v1030 = vsel %vm81, %v1025, %v1028
    %v1032 = vsel %vm52, %v1030, 0
    %1034 = vmatpush.msra.mxu0 0.0
    %1035 = vmatpush.msra.mxu0 0.0
    %1036 = vmatpush.msra.mxu0 0.0
    %1037 = vmatpush.msra.mxu0 0.0
    %1038 = vmatpush.msra.mxu0 0.0
    %1039 = vmatpush.msra.mxu0 0.0
    %1040 = vmatpush.msra.mxu0 0.0
    %1041 = vmatpush.msra.mxu0 0.0
    %1042 = vmatpush.msra.mxu0 %v425
    %1043 = vmatpush.msra.mxu0 %v424
    %1044 = vmatpush.msra.mxu0 %v423
    %1045 = vmatpush.msra.mxu0 %v422
    %1046 = vmatpush.msra.mxu0 %v421
    %1047 = vmatpush.msra.mxu0 %v420
    %1048 = vmatpush.msra.mxu0 %v419
    %1049 = vmatpush.msra.mxu0 %v418
    %1050 = vmatmul.f32.gmra.mxu0 %v1032
    %v1051 = vpop.f32.mrf.mxu0
    %v1052 = vadd.f32 %v426, %v1051
    %1053 = vdwg.mxu0
    %v1054 = vxor.u32 %v1052, 2147483648
    %v1055 = vmul.f32 %v1054, 1.442695
    %v1056 = vpow.pop %v1055
    %v1057 = vadd.f32 %v1056, 1.0
    %v1058 = vrcp.pop %v1057
    %v1059 = vmul.f32 %v1057, %v1058
    %v1060 = vsub.f32 1.0, %v1059
    %v1061 = vmul.f32 %v1058, %v1060
    %v1062 = vadd.f32 %v1058, %v1061
    %vm1063 = vweird.f32 %v1057
    %vm1064 = vweird.f32 %v1058
    %vm1065 = vmor %vm1063, %vm1064
    %v1066 = vsel %vm1065, %v1058, %v1062
    %v1067 = vand.u32 2147483647, %v1057
    %vm1068 = vcmp.eq.f32.partialorder %v1067, 8.507059e+37
    %v1069 = vand.u32 %v1057, 2147483648
    %v1070 = vor.u32 1.1754944e-38, %v1069
    %v1071 = vsel %vm1068, %v1070, %v1066
    %v1072 = vmul.f32 1.0, %v1071
    %v1073 = vmul.f32 %v1072, 2.0
    %v1074 = vsub.f32 %v1073, 1.0
    %v1075 = vmul.f32 %v1072, %v884
    %1077 = vrot.lane.b32.xlu0 %v1074, 64
    %v1078 = vpop.permute.xlu0 %1077
    %v1080 = vmul.f32 %v1072, %v1078
    %1082 = vrot.lane.b32.xlu0 %v1080, 32
    %v1083 = vpop.permute.xlu0 %1082
    %v1085 = vadd.f32 %v1075, %v1083
    %v1086 = vtanh.pop %v1085
    %1088 = vrot.lane.b32.xlu0 %v1086, 64
    %v1089 = vpop.permute.xlu0 %1088
    %v1091 = vmul.f32 %v1072, %v1089
    %1093 = vrot.lane.b32.xlu0 %v953, 32
    %v1094 = vpop.permute.xlu0 %1093
    %v1095 = vsel %vm81, %v1094, 0
    %1097 = vmatpush.msra.mxu0 0.0
    %1098 = vmatpush.msra.mxu0 0.0
    %1099 = vmatpush.msra.mxu0 0.0
    %1100 = vmatpush.msra.mxu0 0.0
    %1101 = vmatpush.msra.mxu0 0.0
    %1102 = vmatpush.msra.mxu0 0.0
    %1103 = vmatpush.msra.mxu0 0.0
    %1104 = vmatpush.msra.mxu0 0.0
    %1105 = vmatpush.msra.mxu0 0.0
    %1106 = vmatpush.msra.mxu0 0.0
    %1107 = vmatpush.msra.mxu0 0.0
    %1108 = vmatpush.msra.mxu0 0.0
    %1109 = vmatpush.msra.mxu0 %v80
    %1110 = vmatpush.msra.mxu0 %v79
    %1111 = vmatpush.msra.mxu0 %v78
    %1112 = vmatpush.msra.mxu0 %v77
    %1113 = vmatmul.f32.gmra.mxu0 %v1095
    %v1114 = vpop.f32.mrf.mxu0
    %v1115 = vadd.f32 %v76, %v1114
    %1116 = vdwg.mxu0
    %v1117 = vxor.u32 %v1115, 2147483648
    %v1118 = vmul.f32 %v1117, 1.442695
    %v1119 = vpow.pop %v1118
    %v1120 = vadd.f32 %v1119, 1.0
    %v1121 = vrcp.pop %v1120
    %v1122 = vmul.f32 %v1120, %v1121
    %v1123 = vsub.f32 1.0, %v1122
    %v1124 = vmul.f32 %v1121, %v1123
    %v1125 = vadd.f32 %v1121, %v1124
    %vm1126 = vweird.f32 %v1120
    %vm1127 = vweird.f32 %v1121
    %vm1128 = vmor %vm1126, %vm1127
    %v1129 = vsel %vm1128, %v1121, %v1125
    %v1130 = vand.u32 2147483647, %v1120
    %vm1131 = vcmp.eq.f32.partialorder %v1130, 8.507059e+37
    %v1132 = vand.u32 %v1120, 2147483648
    %v1133 = vor.u32 1.1754944e-38, %v1132
    %v1134 = vsel %vm1131, %v1133, %v1129
    %v1135 = vmul.f32 1.0, %v1134
    %v1136 = vmul.f32 %v1135, 2.0
    %v1137 = vsub.f32 %v1136, 1.0
    %v1138 = vmul.f32 %v1135, %v947
    %1140 = vrot.lane.b32.xlu0 %v1137, 64
    %v1141 = vpop.permute.xlu0 %1140
    %v1143 = vmul.f32 %v1135, %v1141
    %1145 = vrot.lane.b32.xlu0 %v1143, 32
    %v1146 = vpop.permute.xlu0 %1145
    %v1148 = vadd.f32 %v1138, %v1146
    %v1149 = vtanh.pop %v1148
    %1151 = vrot.lane.b32.xlu0 %v1149, 64
    %v1152 = vpop.permute.xlu0 %1151
    %v1154 = vmul.f32 %v1135, %v1152
    %1156 = vrot.lane.b32.xlu0 %v1022, 32
    %v1157 = vpop.permute.xlu0 %1156
    %1159 = vrot.lane.b32.xlu0 %v953, 64
    %v1160 = vpop.permute.xlu0 %1159
    %v1162 = vsel %vm81, %v1157, %v1160
    %v1164 = vsel %vm52, %v1162, 0
    %1166 = vmatpush.msra.mxu0 0.0
    %1167 = vmatpush.msra.mxu0 0.0
    %1168 = vmatpush.msra.mxu0 0.0
    %1169 = vmatpush.msra.mxu0 0.0
    %1170 = vmatpush.msra.mxu0 0.0
    %1171 = vmatpush.msra.mxu0 0.0
    %1172 = vmatpush.msra.mxu0 0.0
    %1173 = vmatpush.msra.mxu0 0.0
    %1174 = vmatpush.msra.mxu0 %v217
    %1175 = vmatpush.msra.mxu0 %v216
    %1176 = vmatpush.msra.mxu0 %v215
    %1177 = vmatpush.msra.mxu0 %v214
    %1178 = vmatpush.msra.mxu0 %v213
    %1179 = vmatpush.msra.mxu0 %v212
    %1180 = vmatpush.msra.mxu0 %v211
    %1181 = vmatpush.msra.mxu0 %v210
    %1182 = vmatmul.f32.gmra.mxu0 %v1164
    %v1183 = vpop.f32.mrf.mxu0
    %v1184 = vadd.f32 %v219, %v1183
    %1185 = vdwg.mxu0
    %v1186 = vxor.u32 %v1184, 2147483648
    %v1187 = vmul.f32 %v1186, 1.442695
    %v1188 = vpow.pop %v1187
    %v1189 = vadd.f32 %v1188, 1.0
    %v1190 = vrcp.pop %v1189
    %v1191 = vmul.f32 %v1189, %v1190
    %v1192 = vsub.f32 1.0, %v1191
    %v1193 = vmul.f32 %v1190, %v1192
    %v1194 = vadd.f32 %v1190, %v1193
    %vm1195 = vweird.f32 %v1189
    %vm1196 = vweird.f32 %v1190
    %vm1197 = vmor %vm1195, %vm1196
    %v1198 = vsel %vm1197, %v1190, %v1194
    %v1199 = vand.u32 2147483647, %v1189
    %vm1200 = vcmp.eq.f32.partialorder %v1199, 8.507059e+37
    %v1201 = vand.u32 %v1189, 2147483648
    %v1202 = vor.u32 1.1754944e-38, %v1201
    %v1203 = vsel %vm1200, %v1202, %v1198
    %v1204 = vmul.f32 1.0, %v1203
    %v1205 = vmul.f32 %v1204, 2.0
    %v1206 = vsub.f32 %v1205, 1.0
    %v1207 = vmul.f32 %v1204, %v1016
    %1209 = vrot.lane.b32.xlu0 %v1206, 64
    %v1210 = vpop.permute.xlu0 %1209
    %v1212 = vmul.f32 %v1204, %v1210
    %1214 = vrot.lane.b32.xlu0 %v1212, 32
    %v1215 = vpop.permute.xlu0 %1214
    %v1217 = vadd.f32 %v1207, %v1215
    %v1218 = vtanh.pop %v1217
    %1220 = vrot.lane.b32.xlu0 %v1218, 64
    %v1221 = vpop.permute.xlu0 %1220
    %v1223 = vmul.f32 %v1204, %v1221
    %1225 = vrot.lane.b32.xlu0 %v1091, 32
    %v1226 = vpop.permute.xlu0 %1225
    %1228 = vrot.lane.b32.xlu0 %v1022, 64
    %v1229 = vpop.permute.xlu0 %1228
    %v1231 = vsel %vm81, %v1226, %v1229
    %v1233 = vsel %vm52, %v1231, 0
    %1235 = vmatpush.msra.mxu0 0.0
    %1236 = vmatpush.msra.mxu0 0.0
    %1237 = vmatpush.msra.mxu0 0.0
    %1238 = vmatpush.msra.mxu0 0.0
    %1239 = vmatpush.msra.mxu0 0.0
    %1240 = vmatpush.msra.mxu0 0.0
    %1241 = vmatpush.msra.mxu0 0.0
    %1242 = vmatpush.msra.mxu0 0.0
    %1243 = vmatpush.msra.mxu0 %v425
    %1244 = vmatpush.msra.mxu0 %v424
    %1245 = vmatpush.msra.mxu0 %v423
    %1246 = vmatpush.msra.mxu0 %v422
    %1247 = vmatpush.msra.mxu0 %v421
    %1248 = vmatpush.msra.mxu0 %v420
    %1249 = vmatpush.msra.mxu0 %v419
    %1250 = vmatpush.msra.mxu0 %v418
    %1251 = vmatmul.f32.gmra.mxu0 %v1233
    %v1252 = vpop.f32.mrf.mxu0
    %v1253 = vadd.f32 %v426, %v1252
    %1254 = vdwg.mxu0
    %v1255 = vxor.u32 %v1253, 2147483648
    %v1256 = vmul.f32 %v1255, 1.442695
    %v1257 = vpow.pop %v1256
    %v1258 = vadd.f32 %v1257, 1.0
    %v1259 = vrcp.pop %v1258
    %v1260 = vmul.f32 %v1258, %v1259
    %v1261 = vsub.f32 1.0, %v1260
    %v1262 = vmul.f32 %v1259, %v1261
    %v1263 = vadd.f32 %v1259, %v1262
    %vm1264 = vweird.f32 %v1258
    %vm1265 = vweird.f32 %v1259
    %vm1266 = vmor %vm1264, %vm1265
    %v1267 = vsel %vm1266, %v1259, %v1263
    %v1268 = vand.u32 2147483647, %v1258
    %vm1269 = vcmp.eq.f32.partialorder %v1268, 8.507059e+37
    %v1270 = vand.u32 %v1258, 2147483648
    %v1271 = vor.u32 1.1754944e-38, %v1270
    %v1272 = vsel %vm1269, %v1271, %v1267
    %v1273 = vmul.f32 1.0, %v1272
    %v1274 = vmul.f32 %v1273, 2.0
    %v1275 = vsub.f32 %v1274, 1.0
    %v1276 = vmul.f32 %v1273, %v1085
    %1278 = vrot.lane.b32.xlu0 %v1275, 64
    %v1279 = vpop.permute.xlu0 %1278
    %v1281 = vmul.f32 %v1273, %v1279
    %1283 = vrot.lane.b32.xlu0 %v1281, 32
    %v1284 = vpop.permute.xlu0 %1283
    %v1286 = vadd.f32 %v1276, %v1284
    %v1287 = vtanh.pop %v1286
    %1289 = vrot.lane.b32.xlu0 %v1287, 64
    %v1290 = vpop.permute.xlu0 %1289
    %v1292 = vmul.f32 %v1273, %v1290
    %1294 = vrot.lane.b32.xlu0 %v1154, 32
    %v1295 = vpop.permute.xlu0 %1294
    %v1296 = vsel %vm81, %v1295, 0
    %1298 = vmatpush.msra.mxu0 0.0
    %1299 = vmatpush.msra.mxu0 0.0
    %1300 = vmatpush.msra.mxu0 0.0
    %1301 = vmatpush.msra.mxu0 0.0
    %1302 = vmatpush.msra.mxu0 0.0
    %1303 = vmatpush.msra.mxu0 0.0
    %1304 = vmatpush.msra.mxu0 0.0
    %1305 = vmatpush.msra.mxu0 0.0
    %1306 = vmatpush.msra.mxu0 0.0
    %1307 = vmatpush.msra.mxu0 0.0
    %1308 = vmatpush.msra.mxu0 0.0
    %1309 = vmatpush.msra.mxu0 0.0
    %1310 = vmatpush.msra.mxu0 %v80
    %1311 = vmatpush.msra.mxu0 %v79
    %1312 = vmatpush.msra.mxu0 %v78
    %1313 = vmatpush.msra.mxu0 %v77
    %1314 = vmatmul.f32.gmra.mxu0 %v1296
    %v1315 = vpop.f32.mrf.mxu0
    %v1316 = vadd.f32 %v76, %v1315
    %1317 = vdwg.mxu0
    %v1318 = vxor.u32 %v1316, 2147483648
    %v1319 = vmul.f32 %v1318, 1.442695
    %v1320 = vpow.pop %v1319
    %v1321 = vadd.f32 %v1320, 1.0
    %v1322 = vrcp.pop %v1321
    %v1323 = vmul.f32 %v1321, %v1322
    %v1324 = vsub.f32 1.0, %v1323
    %v1325 = vmul.f32 %v1322, %v1324
    %v1326 = vadd.f32 %v1322, %v1325
    %vm1327 = vweird.f32 %v1321
    %vm1328 = vweird.f32 %v1322
    %vm1329 = vmor %vm1327, %vm1328
    %v1330 = vsel %vm1329, %v1322, %v1326
    %v1331 = vand.u32 2147483647, %v1321
    %vm1332 = vcmp.eq.f32.partialorder %v1331, 8.507059e+37
    %v1333 = vand.u32 %v1321, 2147483648
    %v1334 = vor.u32 1.1754944e-38, %v1333
    %v1335 = vsel %vm1332, %v1334, %v1330
    %v1336 = vmul.f32 1.0, %v1335
    %v1337 = vmul.f32 %v1336, 2.0
    %v1338 = vsub.f32 %v1337, 1.0
    %v1339 = vmul.f32 %v1336, %v1148
    %1341 = vrot.lane.b32.xlu0 %v1338, 64
    %v1342 = vpop.permute.xlu0 %1341
    %v1344 = vmul.f32 %v1336, %v1342
    %1346 = vrot.lane.b32.xlu0 %v1344, 32
    %v1347 = vpop.permute.xlu0 %1346
    %v1349 = vadd.f32 %v1339, %v1347
    %v1350 = vtanh.pop %v1349
    %1352 = vrot.lane.b32.xlu0 %v1350, 64
    %v1353 = vpop.permute.xlu0 %1352
    %v1355 = vmul.f32 %v1336, %v1353
    %1357 = vrot.lane.b32.xlu0 %v1223, 32
    %v1358 = vpop.permute.xlu0 %1357
    %1360 = vrot.lane.b32.xlu0 %v1154, 64
    %v1361 = vpop.permute.xlu0 %1360
    %v1363 = vsel %vm81, %v1358, %v1361
    %v1365 = vsel %vm52, %v1363, 0
    %1367 = vmatpush.msra.mxu0 0.0
    %1368 = vmatpush.msra.mxu0 0.0
    %1369 = vmatpush.msra.mxu0 0.0
    %1370 = vmatpush.msra.mxu0 0.0
    %1371 = vmatpush.msra.mxu0 0.0
    %1372 = vmatpush.msra.mxu0 0.0
    %1373 = vmatpush.msra.mxu0 0.0
    %1374 = vmatpush.msra.mxu0 0.0
    %1375 = vmatpush.msra.mxu0 %v217
    %1376 = vmatpush.msra.mxu0 %v216
    %1377 = vmatpush.msra.mxu0 %v215
    %1378 = vmatpush.msra.mxu0 %v214
    %1379 = vmatpush.msra.mxu0 %v213
    %1380 = vmatpush.msra.mxu0 %v212
    %1381 = vmatpush.msra.mxu0 %v211
    %1382 = vmatpush.msra.mxu0 %v210
    %1383 = vmatmul.f32.gmra.mxu0 %v1365
    %v1384 = vpop.f32.mrf.mxu0
    %v1385 = vadd.f32 %v219, %v1384
    %1386 = vdwg.mxu0
    %v1387 = vxor.u32 %v1385, 2147483648
    %v1388 = vmul.f32 %v1387, 1.442695
    %v1389 = vpow.pop %v1388
    %v1390 = vadd.f32 %v1389, 1.0
    %v1391 = vrcp.pop %v1390
    %v1392 = vmul.f32 %v1390, %v1391
    %v1393 = vsub.f32 1.0, %v1392
    %v1394 = vmul.f32 %v1391, %v1393
    %v1395 = vadd.f32 %v1391, %v1394
    %vm1396 = vweird.f32 %v1390
    %vm1397 = vweird.f32 %v1391
    %vm1398 = vmor %vm1396, %vm1397
    %v1399 = vsel %vm1398, %v1391, %v1395
    %v1400 = vand.u32 2147483647, %v1390
    %vm1401 = vcmp.eq.f32.partialorder %v1400, 8.507059e+37
    %v1402 = vand.u32 %v1390, 2147483648
    %v1403 = vor.u32 1.1754944e-38, %v1402
    %v1404 = vsel %vm1401, %v1403, %v1399
    %v1405 = vmul.f32 1.0, %v1404
    %v1406 = vmul.f32 %v1405, 2.0
    %v1407 = vsub.f32 %v1406, 1.0
    %v1408 = vmul.f32 %v1405, %v1217
    %1410 = vrot.lane.b32.xlu0 %v1407, 64
    %v1411 = vpop.permute.xlu0 %1410
    %v1413 = vmul.f32 %v1405, %v1411
    %1415 = vrot.lane.b32.xlu0 %v1413, 32
    %v1416 = vpop.permute.xlu0 %1415
    %v1418 = vadd.f32 %v1408, %v1416
    %v1419 = vtanh.pop %v1418
    %1421 = vrot.lane.b32.xlu0 %v1419, 64
    %v1422 = vpop.permute.xlu0 %1421
    %v1424 = vmul.f32 %v1405, %v1422
    %1426 = vrot.lane.b32.xlu0 %v1292, 32
    %v1427 = vpop.permute.xlu0 %1426
    %1429 = vrot.lane.b32.xlu0 %v1223, 64
    %v1430 = vpop.permute.xlu0 %1429
    %v1432 = vsel %vm81, %v1427, %v1430
    %v1434 = vsel %vm52, %v1432, 0
    %1436 = vmatpush.msra.mxu0 0.0
    %1437 = vmatpush.msra.mxu0 0.0
    %1438 = vmatpush.msra.mxu0 0.0
    %1439 = vmatpush.msra.mxu0 0.0
    %1440 = vmatpush.msra.mxu0 0.0
    %1441 = vmatpush.msra.mxu0 0.0
    %1442 = vmatpush.msra.mxu0 0.0
    %1443 = vmatpush.msra.mxu0 0.0
    %1444 = vmatpush.msra.mxu0 %v425
    %1445 = vmatpush.msra.mxu0 %v424
    %1446 = vmatpush.msra.mxu0 %v423
    %1447 = vmatpush.msra.mxu0 %v422
    %1448 = vmatpush.msra.mxu0 %v421
    %1449 = vmatpush.msra.mxu0 %v420
    %1450 = vmatpush.msra.mxu0 %v419
    %1451 = vmatpush.msra.mxu0 %v418
    %1452 = vmatmul.f32.gmra.mxu0 %v1434
    %v1453 = vpop.f32.mrf.mxu0
    %v1454 = vadd.f32 %v426, %v1453
    %1455 = vdwg.mxu0
    %v1456 = vxor.u32 %v1454, 2147483648
    %v1457 = vmul.f32 %v1456, 1.442695
    %v1458 = vpow.pop %v1457
    %v1459 = vadd.f32 %v1458, 1.0
    %v1460 = vrcp.pop %v1459
    %v1461 = vmul.f32 %v1459, %v1460
    %v1462 = vsub.f32 1.0, %v1461
    %v1463 = vmul.f32 %v1460, %v1462
    %v1464 = vadd.f32 %v1460, %v1463
    %vm1465 = vweird.f32 %v1459
    %vm1466 = vweird.f32 %v1460
    %vm1467 = vmor %vm1465, %vm1466
    %v1468 = vsel %vm1467, %v1460, %v1464
    %v1469 = vand.u32 2147483647, %v1459
    %vm1470 = vcmp.eq.f32.partialorder %v1469, 8.507059e+37
    %v1471 = vand.u32 %v1459, 2147483648
    %v1472 = vor.u32 1.1754944e-38, %v1471
    %v1473 = vsel %vm1470, %v1472, %v1468
    %v1474 = vmul.f32 1.0, %v1473
    %v1475 = vmul.f32 %v1474, 2.0
    %v1476 = vsub.f32 %v1475, 1.0
    %v1477 = vmul.f32 %v1474, %v1286
    %1479 = vrot.lane.b32.xlu0 %v1476, 64
    %v1480 = vpop.permute.xlu0 %1479
    %v1482 = vmul.f32 %v1474, %v1480
    %1484 = vrot.lane.b32.xlu0 %v1482, 32
    %v1485 = vpop.permute.xlu0 %1484
    %v1487 = vadd.f32 %v1477, %v1485
    %v1488 = vtanh.pop %v1487
    %1490 = vrot.lane.b32.xlu0 %v1488, 64
    %v1491 = vpop.permute.xlu0 %1490
    %v1493 = vmul.f32 %v1474, %v1491
    %1495 = vrot.lane.b32.xlu0 %v1424, 32
    %v1496 = vpop.permute.xlu0 %1495
    %1499 = vrot.lane.b32.xlu0 %v1355, 64
    %v1500 = vpop.permute.xlu0 %1499
    %v1502 = vsel %vm81, %v1496, %v1500
    %v1504 = vsel %vm52, %v1502, 0
    %1506 = vmatpush.msra.mxu0 0.0
    %1507 = vmatpush.msra.mxu0 0.0
    %1508 = vmatpush.msra.mxu0 0.0
    %1509 = vmatpush.msra.mxu0 0.0
    %1510 = vmatpush.msra.mxu0 0.0
    %1511 = vmatpush.msra.mxu0 0.0
    %1512 = vmatpush.msra.mxu0 0.0
    %1513 = vmatpush.msra.mxu0 0.0
    %1514 = vmatpush.msra.mxu0 %v217
    %1515 = vmatpush.msra.mxu0 %v216
    %1516 = vmatpush.msra.mxu0 %v215
    %1517 = vmatpush.msra.mxu0 %v214
    %1518 = vmatpush.msra.mxu0 %v213
    %1519 = vmatpush.msra.mxu0 %v212
    %1520 = vmatpush.msra.mxu0 %v211
    %1521 = vmatpush.msra.mxu0 %v210
    %1522 = vmatmul.f32.gmra.mxu0 %v1504
    %v1523 = vpop.f32.mrf.mxu0
    %v1524 = vadd.f32 %v219, %v1523
    %1525 = vdwg.mxu0
    %v1526 = vxor.u32 %v1524, 2147483648
    %v1527 = vmul.f32 %v1526, 1.442695
    %v1528 = vpow.pop %v1527
    %v1529 = vadd.f32 %v1528, 1.0
    %v1530 = vrcp.pop %v1529
    %v1531 = vmul.f32 %v1529, %v1530
    %v1532 = vsub.f32 1.0, %v1531
    %v1533 = vmul.f32 %v1530, %v1532
    %v1534 = vadd.f32 %v1530, %v1533
    %vm1535 = vweird.f32 %v1529
    %vm1536 = vweird.f32 %v1530
    %vm1537 = vmor %vm1535, %vm1536
    %v1538 = vsel %vm1537, %v1530, %v1534
    %v1539 = vand.u32 2147483647, %v1529
    %vm1540 = vcmp.eq.f32.partialorder %v1539, 8.507059e+37
    %v1541 = vand.u32 %v1529, 2147483648
    %v1542 = vor.u32 1.1754944e-38, %v1541
    %v1543 = vsel %vm1540, %v1542, %v1538
    %v1544 = vmul.f32 1.0, %v1543
    %v1545 = vmul.f32 %v1544, 2.0
    %v1546 = vsub.f32 %v1545, 1.0
    %v1547 = vmul.f32 %v1544, %v1418
    %1549 = vrot.lane.b32.xlu0 %v1546, 64
    %v1550 = vpop.permute.xlu0 %1549
    %v1552 = vmul.f32 %v1544, %v1550
    %1554 = vrot.lane.b32.xlu0 %v1552, 32
    %v1555 = vpop.permute.xlu0 %1554
    %v1557 = vadd.f32 %v1547, %v1555
    %v1558 = vtanh.pop %v1557
    %1560 = vrot.lane.b32.xlu0 %v1558, 64
    %v1561 = vpop.permute.xlu0 %1560
    %v1563 = vmul.f32 %v1544, %v1561
    %1565 = vrot.lane.b32.xlu0 %v1493, 32
    %v1566 = vpop.permute.xlu0 %1565
    %1568 = vrot.lane.b32.xlu0 %v1424, 64
    %v1569 = vpop.permute.xlu0 %1568
    %v1571 = vsel %vm81, %v1566, %v1569
    %v1573 = vsel %vm52, %v1571, 0
    %1575 = vmatpush.msra.mxu0 0.0
    %1576 = vmatpush.msra.mxu0 0.0
    %1577 = vmatpush.msra.mxu0 0.0
    %1578 = vmatpush.msra.mxu0 0.0
    %1579 = vmatpush.msra.mxu0 0.0
    %1580 = vmatpush.msra.mxu0 0.0
    %1581 = vmatpush.msra.mxu0 0.0
    %1582 = vmatpush.msra.mxu0 0.0
    %1583 = vmatpush.msra.mxu0 %v425
    %1584 = vmatpush.msra.mxu0 %v424
    %1585 = vmatpush.msra.mxu0 %v423
    %1586 = vmatpush.msra.mxu0 %v422
    %1587 = vmatpush.msra.mxu0 %v421
    %1588 = vmatpush.msra.mxu0 %v420
    %1589 = vmatpush.msra.mxu0 %v419
    %1590 = vmatpush.msra.mxu0 %v418
    %1591 = vmatmul.f32.gmra.mxu0 %v1573
    %v1592 = vpop.f32.mrf.mxu0
    %v1593 = vadd.f32 %v426, %v1592
    %1594 = vdwg.mxu0
    %v1595 = vxor.u32 %v1593, 2147483648
    %v1596 = vmul.f32 %v1595, 1.442695
    %v1597 = vpow.pop %v1596
    %v1598 = vadd.f32 %v1597, 1.0
    %v1599 = vrcp.pop %v1598
    %v1600 = vmul.f32 %v1598, %v1599
    %v1601 = vsub.f32 1.0, %v1600
    %v1602 = vmul.f32 %v1599, %v1601
    %v1603 = vadd.f32 %v1599, %v1602
    %vm1604 = vweird.f32 %v1598
    %vm1605 = vweird.f32 %v1599
    %vm1606 = vmor %vm1604, %vm1605
    %v1607 = vsel %vm1606, %v1599, %v1603
    %v1608 = vand.u32 2147483647, %v1598
    %vm1609 = vcmp.eq.f32.partialorder %v1608, 8.507059e+37
    %v1610 = vand.u32 %v1598, 2147483648
    %v1611 = vor.u32 1.1754944e-38, %v1610
    %v1612 = vsel %vm1609, %v1611, %v1607
    %v1613 = vmul.f32 1.0, %v1612
    %v1614 = vmul.f32 %v1613, 2.0
    %v1615 = vsub.f32 %v1614, 1.0
    %v1616 = vmul.f32 %v1613, %v1487
    %1618 = vrot.lane.b32.xlu0 %v1615, 64
    %v1619 = vpop.permute.xlu0 %1618
    %v1621 = vmul.f32 %v1613, %v1619
    %1623 = vrot.lane.b32.xlu0 %v1621, 32
    %v1624 = vpop.permute.xlu0 %1623
    %v1626 = vadd.f32 %v1616, %v1624
    %v1627 = vtanh.pop %v1626
    %1629 = vrot.lane.b32.xlu0 %v1627, 64
    %v1630 = vpop.permute.xlu0 %1629
    %v1632 = vmul.f32 %v1613, %v1630
    %1634 = vrot.lane.b32.xlu0 %v1632, 32
    %v1635 = vpop.permute.xlu0 %1634
    %1638 = vrot.lane.b32.xlu0 %v1563, 64
    %v1639 = vpop.permute.xlu0 %1638
    %v1641 = vsel %vm81, %v1635, %v1639
    %v1643 = vsel %vm52, %v1641, 0
    %1645 = vmatpush.msra.mxu0 0.0
    %1646 = vmatpush.msra.mxu0 0.0
    %1647 = vmatpush.msra.mxu0 0.0
    %1648 = vmatpush.msra.mxu0 0.0
    %1649 = vmatpush.msra.mxu0 0.0
    %1650 = vmatpush.msra.mxu0 0.0
    %1651 = vmatpush.msra.mxu0 0.0
    %1652 = vmatpush.msra.mxu0 0.0
    %1653 = vmatpush.msra.mxu0 %v425
    %1654 = vmatpush.msra.mxu0 %v424
    %1655 = vmatpush.msra.mxu0 %v423
    %1656 = vmatpush.msra.mxu0 %v422
    %1657 = vmatpush.msra.mxu0 %v421
    %1658 = vmatpush.msra.mxu0 %v420
    %1659 = vmatpush.msra.mxu0 %v419
    %1660 = vmatpush.msra.mxu0 %v418
    %1661 = vmatmul.f32.gmra.mxu0 %v1643
    %v1662 = vpop.f32.mrf.mxu0
    %v1663 = vadd.f32 %v426, %v1662
    %1664 = vdwg.mxu0
    %v1665 = vxor.u32 %v1663, 2147483648
    %v1666 = vmul.f32 %v1665, 1.442695
    %v1667 = vpow.pop %v1666
    %v1668 = vadd.f32 %v1667, 1.0
    %v1669 = vrcp.pop %v1668
    %v1670 = vmul.f32 %v1668, %v1669
    %v1671 = vsub.f32 1.0, %v1670
    %v1672 = vmul.f32 %v1669, %v1671
    %v1673 = vadd.f32 %v1669, %v1672
    %vm1674 = vweird.f32 %v1668
    %vm1675 = vweird.f32 %v1669
    %vm1676 = vmor %vm1674, %vm1675
    %v1677 = vsel %vm1676, %v1669, %v1673
    %v1678 = vand.u32 2147483647, %v1668
    %vm1679 = vcmp.eq.f32.partialorder %v1678, 8.507059e+37
    %v1680 = vand.u32 %v1668, 2147483648
    %v1681 = vor.u32 1.1754944e-38, %v1680
    %v1682 = vsel %vm1679, %v1681, %v1677
    %v1683 = vmul.f32 1.0, %v1682
    %v1684 = vmul.f32 %v1683, 2.0
    %v1685 = vsub.f32 %v1684, 1.0
    %v1686 = vmul.f32 %v1683, %v1626
    %1688 = vrot.lane.b32.xlu0 %v1685, 64
    %v1689 = vpop.permute.xlu0 %1688
    %v1691 = vmul.f32 %v1683, %v1689
    %1693 = vrot.lane.b32.xlu0 %v1691, 32
    %v1694 = vpop.permute.xlu0 %1693
    %v1696 = vadd.f32 %v1686, %v1694
    %v1697 = vtanh.pop %v1696
    %1699 = vrot.lane.b32.xlu0 %v1697, 64
    %v1700 = vpop.permute.xlu0 %1699
    %v1702 = vmul.f32 %v1683, %v1700
    %v1703 = vrot.slane %v689, 7
    %v1705 = vrot.slane %v890, 6
    %v1707 = vrot.slane %v1091, 5
    %v1709 = vrot.slane %v1292, 4
    %v1711 = vrot.slane %v1493, 3
    %v1713 = vrot.slane %v1632, 2
    %v1716 = vrot.slane %v1702, 1
    %vm1718 = vcmask 1040384
    %v1719 = vsel %vm1718, %v488, %v1703
    %vm1720 = vcmask 1041408
    %v1721 = vsel %vm1720, %v1719, %v1705
    %vm1722 = vcmask 1042432
    %v1723 = vsel %vm1722, %v1721, %v1707
    %vm1724 = vcmask 1043456
    %v1725 = vsel %vm1724, %v1723, %v1709
    %vm1726 = vcmask 1044480
    %v1727 = vsel %vm1726, %v1725, %v1711
    %vm1728 = vcmask 1045504
    %v1729 = vsel %vm1728, %v1727, %v1713
    %vm1730 = vcmask 1046528
    %v1731 = vsel %vm1730, %v1729, %v1716
    %v1732 = vld [vmem:[#allocation5 + $0xe8] sm:$0xff]
    %v1733 = vld [vmem:[#allocation5 + $0xf0] sm:$0xff]
    %v1734 = vld [vmem:[#allocation5 + $0xf8] sm:$0xff]
    %v1735 = vld [vmem:[#allocation5 + $0x100] sm:$0xff]
    %v1736 = vld [vmem:[#allocation5 + $0xe3] sm:$0x1]
    %v1737 = vperm.slane %v1736, 0
    %1739 = vrot.lane.b32.xlu0 %v1731, 32
    %v1740 = vpop.permute.xlu0 %1739
    %v1741 = vsel %vm81, %v1740, 0
    %1743 = vmatpush.msra.mxu0 0.0
    %1744 = vmatpush.msra.mxu0 0.0
    %1745 = vmatpush.msra.mxu0 0.0
    %1746 = vmatpush.msra.mxu0 0.0
    %1747 = vmatpush.msra.mxu0 0.0
    %1748 = vmatpush.msra.mxu0 0.0
    %1749 = vmatpush.msra.mxu0 0.0
    %1750 = vmatpush.msra.mxu0 0.0
    %1751 = vmatpush.msra.mxu0 0.0
    %1752 = vmatpush.msra.mxu0 0.0
    %1753 = vmatpush.msra.mxu0 0.0
    %1754 = vmatpush.msra.mxu0 0.0
    %1755 = vmatpush.msra.mxu0 %v1735
    %1756 = vmatpush.msra.mxu0 %v1734
    %1757 = vmatpush.msra.mxu0 %v1733
    %1758 = vmatpush.msra.mxu0 %v1732
    %1759 = vmatmul.f32.gmra.mxu0 %v1741
    %v1760 = vpop.f32.mrf.mxu0
    %v1761 = vadd.f32 %v1737, %v1760
    %1762 = vdwg.mxu0
    %1763 = vst [vmem:[#allocation7] sm:$0xff] %v1761
    // Predicated region
    $region18: #{tpu_custom_call.1} parent=1 // pred_check
      _
    $region19: #{tpu_custom_call.1} parent=1 // pred_check_branch
      %1765 = sbr.rel (0) target = $region21
    $region20: #{tpu_custom_call.1} parent=1 // pred_region
      %1767 = vsyncadd [#allocation4], 0
      %s1769 = sshll.u32 [#allocation7], 4
      %s1770 = int_to_ptr.vmem [resolvable:$true] %s1769
      %s1771 = sshll.u32 %s2, 4
      %s1772 = int_to_ptr.hbm [resolvable:$true] %s1771
      %1774 = dma.vmem_to_hbm [thread:$0]  %s1770, 128, %s1772, [#allocation4]
    $region21: #{tpu_custom_call.1} parent=1 // pred_fallthru
      _
    // Predicated region
    $region22: #{tpu_custom_call.1} parent=1 // pred_check
      _
    $region23: #{tpu_custom_call.1} parent=1 // pred_check_branch
      %1776 = sbr.rel (0) target = $region25
    $region24: #{tpu_custom_call.1} parent=1 // pred_region
      %1778 = dma.done [#allocation4], 128
    $region25: #{tpu_custom_call.1} parent=1 // pred_fallthru
      _
    %1779 = vsyncpa [#allocation3], 1
    %1780 = vsyncpa [#allocation6], 1
    %1781 = vsyncpa [#allocation4], 1

</llo_original>
